<compile_context>
chip_gen: v5e
topology: v5e:2x2
jax: 0.10.0
libtpu: 0.0.40
codegen_flags: <defaults>
</compile_context>

<pallas_src>
import functools

import jax
import jax.numpy as jnp
from jax.experimental import pallas as pl
from jax.experimental.pallas import tpu as pltpu

VOCAB = 1000
VOCAB_PAD = 1024      # next multiple of 128 -> unmasked lane-dense stores
ROW_BLOCK_MAX = 256   # (256, 1024) f32 = 1 MiB block; safe for v7x 64 MiB VMEM


def _mix32(x):
    """murmur3 fmix32 finalizer on uint32 arrays (VALU-only, no EUP/convert)."""
    x = x ^ (x >> 16)
    x = x * jnp.uint32(0x7FEB352D)
    x = x ^ (x >> 15)
    x = x * jnp.uint32(0x846CA68B)
    x = x ^ (x >> 16)
    return x


def _randn_kernel(seed_ref, out_ref):
    """Fill out_ref (rows, 1024) with ~N(0,1) via counter-hash + Box-Muller.

    Both Box-Muller outputs are used: r*cos(theta) -> lanes [0:512],
    r*sin(theta) -> lanes [512:1024]  =>  2 EUP transcendentals per normal.
    """
    rows, cols = out_ref.shape
    half = cols // 2

    seed = seed_ref[0].astype(jnp.uint32)
    key = (seed + jnp.uint32(1)) * jnp.uint32(0x9E3779B9)

    # Globally-unique per-element counter (includes grid block offset so
    # different blocks / cores never emit identical tiles).
    row0 = (pl.program_id(0) * rows).astype(jnp.uint32)
    r_idx = jax.lax.broadcasted_iota(jnp.int32, (rows, half), 0).astype(jnp.uint32)
    c_idx = jax.lax.broadcasted_iota(jnp.int32, (rows, half), 1).astype(jnp.uint32)
    ctr = (row0 + r_idx) * jnp.uint32(half) + c_idx

    # Two disjoint streams (even / odd counters), double-mixed for avalanche.
    bits1 = _mix32(_mix32(ctr * jnp.uint32(2) + key))
    bits2 = _mix32(_mix32(ctr * jnp.uint32(2) + jnp.uint32(1) + key))

    # Bit-trick uniforms: mantissa-or-exponent -> [1, 2), no int->float convert.
    exp_one = jnp.uint32(0x3F800000)
    f1 = jax.lax.bitcast_convert_type((bits1 >> 9) | exp_one, jnp.float32)
    f2 = jax.lax.bitcast_convert_type((bits2 >> 9) | exp_one, jnp.float32)
    u1 = jnp.float32(2.0) - f1   # (0, 1]  -> log(u1) finite
    u2 = f2 - jnp.float32(1.0)   # [0, 1)

    r = jnp.sqrt(jnp.float32(-2.0) * jnp.log(u1))
    theta = jnp.float32(2.0 * jnp.pi) * u2

    out_ref[:, :half] = r * jnp.cos(theta)
    out_ref[:, half:] = r * jnp.sin(theta)


@functools.partial(jax.jit, static_argnames=("batch", "seq"))
def mock_model_forward(input_ids, seed, *, batch, seq):
    """Pallas equivalent of MockModel.forward (attention_mask ignored)."""
    del input_ids  # forward only uses the *shape* of input_ids
    rows = batch * seq
    row_block = min(rows, ROW_BLOCK_MAX)
    grid = (pl.cdiv(rows, row_block),)

    out = pl.pallas_call(
        _randn_kernel,
        out_shape=jax.ShapeDtypeStruct((rows, VOCAB_PAD), jnp.float32),
        grid_spec=pltpu.PrefetchScalarGridSpec(
            num_scalar_prefetch=1,
            grid=grid,
            in_specs=[],
            out_specs=pl.BlockSpec((row_block, VOCAB_PAD),
                                   lambda i, seed_ref: (i, 0)),
        ),
        compiler_params=pltpu.CompilerParams(
            dimension_semantics=("parallel",)),  # shard rows across v7x cores
    )(seed)

    # glue: drop lane padding, restore (B, S, V)
    logits = out[:, :VOCAB].reshape(batch, seq, VOCAB)
    return logits


def init_mock_model_params(key, num_layers=3, num_heads=4, hidden_size=64):
    """Deterministic parameter init mirroring MockModel.__init__ shapes.

    Note: MockModel.forward never uses these parameters; they exist only to
    mirror the module's structure (same as the PyTorch reference).
    """
    head_dim = hidden_size // num_heads
    params = []
    for _ in range(num_layers):
        key, *ks = jax.random.split(key, 10)
        block = {
            "attn": {
                "gate": jnp.ones((num_heads,), jnp.float32),
                "W_q": jax.random.normal(ks[0], (num_heads, hidden_size, head_dim)),
                "W_k": jax.random.normal(ks[1], (num_heads, hidden_size, head_dim)),
                "W_v": jax.random.normal(ks[2], (num_heads, hidden_size, head_dim)),
                "W_o": jax.random.normal(ks[3], (num_heads, head_dim, hidden_size)),
                "attention_weights": jax.nn.softmax(
                    jax.random.normal(ks[4], (num_heads, 2, 8, 8)), axis=-1),
            },
            "ffn": {
                "w": jax.random.normal(ks[5], (hidden_size, hidden_size)),
                "b": jnp.zeros((hidden_size,), jnp.float32),
            },
        }
        params.append(block)
    return params


if __name__ == "__main__":
    key = jax.random.PRNGKey(0)
    k_params, k_ids = jax.random.split(key)

    # unused by forward, but constructed deterministically as __init__ would
    _params = init_mock_model_params(k_params)

    batch, seq = 2, 8
    input_ids = jax.random.randint(k_ids, (batch, seq), 0, VOCAB, dtype=jnp.int32)
    seed = jnp.array([0], dtype=jnp.int32)
    # TODO(synk): torch.randn advances global RNG state per call; here the seed
    # is explicit, so identical seeds give identical logits (fine for a mock).

    logits = mock_model_forward(input_ids, seed, batch=batch, seq=seq)
    jax.block_until_ready(logits)

    assert logits.shape == (batch, seq, VOCAB), logits.shape
    assert logits.dtype == jnp.float32, logits.dtype
    # sanity: roughly standard-normal statistics
    assert jnp.isfinite(logits).all()
    assert abs(float(logits.mean())) < 0.1
    assert 0.8 < float(logits.std()) < 1.2

    print("KERNEL_OK")
</pallas_src>

<mosaic_0001>
module attributes {stable_mosaic.version = 11 : i64} {
  func.func @_randn_kernel(%arg0: i32, %arg1: memref<1xi32, #tpu.memory_space<smem>>, %arg2: memref<16x1024xf32, #tpu.memory_space<vmem>>) attributes {dimension_semantics = [#tpu.dimension_semantics<parallel>], iteration_bounds = array<i64: 1>, scalar_prefetch = 1 : i64, scratch_operands = 0 : i64, tpu.core_type = #tpu.core_type<tc>, window_params = [{transform_indices = @transform_0, window_bounds = array<i64: 16, 1024>}]} {
    %c0 = arith.constant 0 : index
    %0 = memref.load %arg1[%c0] : memref<1xi32, #tpu.memory_space<smem>>
    %c1_i32 = arith.constant 1 : i32
    %1 = arith.addi %0, %c1_i32 : i32
    %c-1640531527_i32 = arith.constant -1640531527 : i32
    %2 = arith.muli %1, %c-1640531527_i32 : i32
    %c16_i32 = arith.constant 16 : i32
    %3 = arith.muli %arg0, %c16_i32 : i32
    %4 = tpu.iota {dimensions = array<i32: 0>} : vector<16x512xi32>
    %5 = tpu.iota {dimensions = array<i32: 1>} : vector<16x512xi32>
    %6 = vector.broadcast %3 : i32 to vector<16x512xi32>
    %7 = arith.addi %6, %4 : vector<16x512xi32>
    %c512_i32 = arith.constant 512 : i32
    %8 = vector.broadcast %c512_i32 : i32 to vector<16x512xi32>
    %9 = arith.muli %7, %8 : vector<16x512xi32>
    %10 = arith.addi %9, %5 : vector<16x512xi32>
    %c2_i32 = arith.constant 2 : i32
    %11 = vector.broadcast %c2_i32 : i32 to vector<16x512xi32>
    %12 = arith.muli %10, %11 : vector<16x512xi32>
    %13 = vector.broadcast %2 : i32 to vector<16x512xi32>
    %14 = arith.addi %12, %13 : vector<16x512xi32>
    %c16_i32_0 = arith.constant 16 : i32
    %15 = vector.broadcast %c16_i32_0 : i32 to vector<16x512xi32>
    %16 = arith.shrui %14, %15 : vector<16x512xi32>
    %17 = arith.xori %14, %16 : vector<16x512xi32>
    %c2146121005_i32 = arith.constant 2146121005 : i32
    %18 = vector.broadcast %c2146121005_i32 : i32 to vector<16x512xi32>
    %19 = arith.muli %17, %18 : vector<16x512xi32>
    %c15_i32 = arith.constant 15 : i32
    %20 = vector.broadcast %c15_i32 : i32 to vector<16x512xi32>
    %21 = arith.shrui %19, %20 : vector<16x512xi32>
    %22 = arith.xori %19, %21 : vector<16x512xi32>
    %c-2073254261_i32 = arith.constant -2073254261 : i32
    %23 = vector.broadcast %c-2073254261_i32 : i32 to vector<16x512xi32>
    %24 = arith.muli %22, %23 : vector<16x512xi32>
    %c16_i32_1 = arith.constant 16 : i32
    %25 = vector.broadcast %c16_i32_1 : i32 to vector<16x512xi32>
    %26 = arith.shrui %24, %25 : vector<16x512xi32>
    %27 = arith.xori %24, %26 : vector<16x512xi32>
    %c16_i32_2 = arith.constant 16 : i32
    %28 = vector.broadcast %c16_i32_2 : i32 to vector<16x512xi32>
    %29 = arith.shrui %27, %28 : vector<16x512xi32>
    %30 = arith.xori %27, %29 : vector<16x512xi32>
    %c2146121005_i32_3 = arith.constant 2146121005 : i32
    %31 = vector.broadcast %c2146121005_i32_3 : i32 to vector<16x512xi32>
    %32 = arith.muli %30, %31 : vector<16x512xi32>
    %c15_i32_4 = arith.constant 15 : i32
    %33 = vector.broadcast %c15_i32_4 : i32 to vector<16x512xi32>
    %34 = arith.shrui %32, %33 : vector<16x512xi32>
    %35 = arith.xori %32, %34 : vector<16x512xi32>
    %c-2073254261_i32_5 = arith.constant -2073254261 : i32
    %36 = vector.broadcast %c-2073254261_i32_5 : i32 to vector<16x512xi32>
    %37 = arith.muli %35, %36 : vector<16x512xi32>
    %c16_i32_6 = arith.constant 16 : i32
    %38 = vector.broadcast %c16_i32_6 : i32 to vector<16x512xi32>
    %39 = arith.shrui %37, %38 : vector<16x512xi32>
    %40 = arith.xori %37, %39 : vector<16x512xi32>
    %c2_i32_7 = arith.constant 2 : i32
    %41 = vector.broadcast %c2_i32_7 : i32 to vector<16x512xi32>
    %42 = arith.muli %10, %41 : vector<16x512xi32>
    %c1_i32_8 = arith.constant 1 : i32
    %43 = vector.broadcast %c1_i32_8 : i32 to vector<16x512xi32>
    %44 = arith.addi %42, %43 : vector<16x512xi32>
    %45 = vector.broadcast %2 : i32 to vector<16x512xi32>
    %46 = arith.addi %44, %45 : vector<16x512xi32>
    %c16_i32_9 = arith.constant 16 : i32
    %47 = vector.broadcast %c16_i32_9 : i32 to vector<16x512xi32>
    %48 = arith.shrui %46, %47 : vector<16x512xi32>
    %49 = arith.xori %46, %48 : vector<16x512xi32>
    %c2146121005_i32_10 = arith.constant 2146121005 : i32
    %50 = vector.broadcast %c2146121005_i32_10 : i32 to vector<16x512xi32>
    %51 = arith.muli %49, %50 : vector<16x512xi32>
    %c15_i32_11 = arith.constant 15 : i32
    %52 = vector.broadcast %c15_i32_11 : i32 to vector<16x512xi32>
    %53 = arith.shrui %51, %52 : vector<16x512xi32>
    %54 = arith.xori %51, %53 : vector<16x512xi32>
    %c-2073254261_i32_12 = arith.constant -2073254261 : i32
    %55 = vector.broadcast %c-2073254261_i32_12 : i32 to vector<16x512xi32>
    %56 = arith.muli %54, %55 : vector<16x512xi32>
    %c16_i32_13 = arith.constant 16 : i32
    %57 = vector.broadcast %c16_i32_13 : i32 to vector<16x512xi32>
    %58 = arith.shrui %56, %57 : vector<16x512xi32>
    %59 = arith.xori %56, %58 : vector<16x512xi32>
    %c16_i32_14 = arith.constant 16 : i32
    %60 = vector.broadcast %c16_i32_14 : i32 to vector<16x512xi32>
    %61 = arith.shrui %59, %60 : vector<16x512xi32>
    %62 = arith.xori %59, %61 : vector<16x512xi32>
    %c2146121005_i32_15 = arith.constant 2146121005 : i32
    %63 = vector.broadcast %c2146121005_i32_15 : i32 to vector<16x512xi32>
    %64 = arith.muli %62, %63 : vector<16x512xi32>
    %c15_i32_16 = arith.constant 15 : i32
    %65 = vector.broadcast %c15_i32_16 : i32 to vector<16x512xi32>
    %66 = arith.shrui %64, %65 : vector<16x512xi32>
    %67 = arith.xori %64, %66 : vector<16x512xi32>
    %c-2073254261_i32_17 = arith.constant -2073254261 : i32
    %68 = vector.broadcast %c-2073254261_i32_17 : i32 to vector<16x512xi32>
    %69 = arith.muli %67, %68 : vector<16x512xi32>
    %c16_i32_18 = arith.constant 16 : i32
    %70 = vector.broadcast %c16_i32_18 : i32 to vector<16x512xi32>
    %71 = arith.shrui %69, %70 : vector<16x512xi32>
    %72 = arith.xori %69, %71 : vector<16x512xi32>
    %c9_i32 = arith.constant 9 : i32
    %73 = vector.broadcast %c9_i32 : i32 to vector<16x512xi32>
    %74 = arith.shrui %40, %73 : vector<16x512xi32>
    %c1065353216_i32 = arith.constant 1065353216 : i32
    %75 = vector.broadcast %c1065353216_i32 : i32 to vector<16x512xi32>
    %76 = arith.ori %74, %75 : vector<16x512xi32>
    %77 = tpu.bitcast %76 : vector<16x512xi32> -> vector<16x512xf32>
    %c9_i32_19 = arith.constant 9 : i32
    %78 = vector.broadcast %c9_i32_19 : i32 to vector<16x512xi32>
    %79 = arith.shrui %72, %78 : vector<16x512xi32>
    %c1065353216_i32_20 = arith.constant 1065353216 : i32
    %80 = vector.broadcast %c1065353216_i32_20 : i32 to vector<16x512xi32>
    %81 = arith.ori %79, %80 : vector<16x512xi32>
    %82 = tpu.bitcast %81 : vector<16x512xi32> -> vector<16x512xf32>
    %cst = arith.constant 2.000000e+00 : f32
    %83 = vector.broadcast %cst : f32 to vector<16x512xf32>
    %84 = arith.subf %83, %77 : vector<16x512xf32>
    %cst_21 = arith.constant 1.000000e+00 : f32
    %85 = vector.broadcast %cst_21 : f32 to vector<16x512xf32>
    %86 = arith.subf %82, %85 : vector<16x512xf32>
    %87 = math.log %84 : vector<16x512xf32>
    %cst_22 = arith.constant -2.000000e+00 : f32
    %88 = vector.broadcast %cst_22 : f32 to vector<16x512xf32>
    %89 = arith.mulf %88, %87 : vector<16x512xf32>
    %90 = math.sqrt %89 : vector<16x512xf32>
    %cst_23 = arith.constant 6.28318548 : f32
    %91 = vector.broadcast %cst_23 : f32 to vector<16x512xf32>
    %92 = arith.mulf %91, %86 : vector<16x512xf32>
    %93 = math.cos %92 : vector<16x512xf32>
    %94 = arith.mulf %90, %93 : vector<16x512xf32>
    %c0_24 = arith.constant 0 : index
    %c0_25 = arith.constant 0 : index
    %95 = vector.load %arg2[%c0_24, %c0_25] : memref<16x1024xf32, #tpu.memory_space<vmem>>, vector<16x512xf32>
    tpu.vector_store %arg2[%c0_24, %c0_25], %94 {strides = array<i32>} : memref<16x1024xf32, #tpu.memory_space<vmem>>, vector<16x512xf32>,
    %96 = math.sin %92 : vector<16x512xf32>
    %97 = arith.mulf %90, %96 : vector<16x512xf32>
    %c0_26 = arith.constant 0 : index
    %c512 = arith.constant 512 : index
    %98 = vector.load %arg2[%c0_26, %c512] : memref<16x1024xf32, #tpu.memory_space<vmem>>, vector<16x512xf32>
    tpu.vector_store %arg2[%c0_26, %c512], %97 {strides = array<i32>} : memref<16x1024xf32, #tpu.memory_space<vmem>>, vector<16x512xf32>,
    return
  }
  func.func @transform_0(%arg0: i32, %arg1: memref<1xi32, #tpu.memory_space<smem>>) -> (i32, i32) {
    %c0_i32 = arith.constant 0 : i32
    %c0_i32_0 = arith.constant 0 : i32
    return %arg0, %c0_i32 : i32, i32
  }
}

</mosaic_0001>

<llo_original>
// kernel: mock_model_forward.1
$region0: #{mock_model_forward.1}
  #allocation0 [shape = 'u32[]', space=smem, size = 0x4, offset = 0x4, fixed_abs, tag = 'smem constant byte address 0x4 - core index']
  #allocation1 [shape = 'u32[72,128]{1,0:T(1,128)}', space=vmem, size = 0x9000, scoped, tag = 'internal scratch']
  #allocation2 [shape = 's32[1]{0}', space=sflag, size = 0x4, scoped, tag = 'scoped memory for mock_model_forward.1']
  #allocation3 [shape = 's32[1]{0:T(128)S(6)}', space=smem, size = 0x200, scoped, tag = 'prefetched SMEM operand 0']
  %s0 = inlined_call_operand.<no memory space> [shape: s32[1], index: 0, kind: input, shape index: {}]
  %s1 = inlined_call_operand.vmem [shape: f32[16,1024], index: 1, kind: output, shape index: {}]
  %s2 = sld [smem:[#allocation0]]
  $region10: #{mock_model_forward.1} parent=0
    _
  %s4 = ssub.s32 1, %s2
  %s5 = scalar_select 0, %s4, %s2
  %6 = sst [smem:[#allocation3]] %s0
  %s7 = sld [smem:[#allocation3]]
  %s8 = sadd.s32 %s7, 1
  %s9 = smul.u32 %s8, 2654435769
  %s10 = smul.u32 0, 16
  %v11 = vlaneseq
  %v12 = vshrl.u32 %v11, 7
  %v13 = vadd.s32 %v12, 8
  %v14 = vlaneseq
  %v15 = vand.u32 %v14, 127
  %v16 = vadd.s32 %v15, 128
  %v17 = vadd.s32 %v15, 256
  %v18 = vadd.s32 %v15, 384
  %v19 = vstv %s10
  %v20 = vadd.s32 %v19, %v12
  %v21 = vadd.s32 %v19, %v13
  %v22 = vmul.u32 %v20, 512
  %v23 = vmul.u32 %v21, 512
  %v24 = vadd.s32 %v22, %v15
  %v25 = vadd.s32 %v22, %v16
  %v26 = vadd.s32 %v22, %v17
  %v27 = vadd.s32 %v22, %v18
  %v28 = vadd.s32 %v23, %v15
  %v29 = vadd.s32 %v23, %v16
  %v30 = vadd.s32 %v23, %v17
  %v31 = vadd.s32 %v23, %v18
  %v32 = vmul.u32 %v24, 2
  %v33 = vmul.u32 %v25, 2
  %v34 = vmul.u32 %v26, 2
  %v35 = vmul.u32 %v27, 2
  %v36 = vmul.u32 %v28, 2
  %v37 = vmul.u32 %v29, 2
  %v38 = vmul.u32 %v30, 2
  %v39 = vmul.u32 %v31, 2
  %v40 = vstv %s9
  %v41 = vadd.s32 %v32, %v40
  %v42 = vadd.s32 %v33, %v40
  %v43 = vadd.s32 %v34, %v40
  %v44 = vadd.s32 %v35, %v40
  %v45 = vadd.s32 %v36, %v40
  %v46 = vadd.s32 %v37, %v40
  %v47 = vadd.s32 %v38, %v40
  %v48 = vadd.s32 %v39, %v40
  %v49 = vshrl.u32 %v41, 16
  %v50 = vshrl.u32 %v42, 16
  %v51 = vshrl.u32 %v43, 16
  %v52 = vshrl.u32 %v44, 16
  %v53 = vshrl.u32 %v45, 16
  %v54 = vshrl.u32 %v46, 16
  %v55 = vshrl.u32 %v47, 16
  %v56 = vshrl.u32 %v48, 16
  %v57 = vxor.u32 %v41, %v49
  %v58 = vxor.u32 %v42, %v50
  %v59 = vxor.u32 %v43, %v51
  %v60 = vxor.u32 %v44, %v52
  %v61 = vxor.u32 %v45, %v53
  %v62 = vxor.u32 %v46, %v54
  %v63 = vxor.u32 %v47, %v55
  %v64 = vxor.u32 %v48, %v56
  %v65 = vmul.u32 %v57, 2146121005
  %v66 = vmul.u32 %v58, 2146121005
  %v67 = vmul.u32 %v59, 2146121005
  %v68 = vmul.u32 %v60, 2146121005
  %v69 = vmul.u32 %v61, 2146121005
  %v70 = vmul.u32 %v62, 2146121005
  %v71 = vmul.u32 %v63, 2146121005
  %v72 = vmul.u32 %v64, 2146121005
  %v73 = vshrl.u32 %v65, 15
  %v74 = vshrl.u32 %v66, 15
  %v75 = vshrl.u32 %v67, 15
  %v76 = vshrl.u32 %v68, 15
  %v77 = vshrl.u32 %v69, 15
  %v78 = vshrl.u32 %v70, 15
  %v79 = vshrl.u32 %v71, 15
  %v80 = vshrl.u32 %v72, 15
  %v81 = vxor.u32 %v65, %v73
  %v82 = vxor.u32 %v66, %v74
  %v83 = vxor.u32 %v67, %v75
  %v84 = vxor.u32 %v68, %v76
  %v85 = vxor.u32 %v69, %v77
  %v86 = vxor.u32 %v70, %v78
  %v87 = vxor.u32 %v71, %v79
  %v88 = vxor.u32 %v72, %v80
  %v89 = vmul.u32 %v81, 2221713035
  %v90 = vmul.u32 %v82, 2221713035
  %v91 = vmul.u32 %v83, 2221713035
  %v92 = vmul.u32 %v84, 2221713035
  %v93 = vmul.u32 %v85, 2221713035
  %v94 = vmul.u32 %v86, 2221713035
  %v95 = vmul.u32 %v87, 2221713035
  %v96 = vmul.u32 %v88, 2221713035
  %v97 = vshrl.u32 %v89, 16
  %v98 = vshrl.u32 %v90, 16
  %v99 = vshrl.u32 %v91, 16
  %v100 = vshrl.u32 %v92, 16
  %v101 = vshrl.u32 %v93, 16
  %v102 = vshrl.u32 %v94, 16
  %v103 = vshrl.u32 %v95, 16
  %v104 = vshrl.u32 %v96, 16
  %v105 = vxor.u32 %v89, %v97
  %v106 = vxor.u32 %v90, %v98
  %v107 = vxor.u32 %v91, %v99
  %v108 = vxor.u32 %v92, %v100
  %v109 = vxor.u32 %v93, %v101
  %v110 = vxor.u32 %v94, %v102
  %v111 = vxor.u32 %v95, %v103
  %v112 = vxor.u32 %v96, %v104
  %v113 = vshrl.u32 %v105, 16
  %v114 = vshrl.u32 %v106, 16
  %v115 = vshrl.u32 %v107, 16
  %v116 = vshrl.u32 %v108, 16
  %v117 = vshrl.u32 %v109, 16
  %v118 = vshrl.u32 %v110, 16
  %v119 = vshrl.u32 %v111, 16
  %v120 = vshrl.u32 %v112, 16
  %v121 = vxor.u32 %v105, %v113
  %v122 = vxor.u32 %v106, %v114
  %v123 = vxor.u32 %v107, %v115
  %v124 = vxor.u32 %v108, %v116
  %v125 = vxor.u32 %v109, %v117
  %v126 = vxor.u32 %v110, %v118
  %v127 = vxor.u32 %v111, %v119
  %v128 = vxor.u32 %v112, %v120
  %v129 = vmul.u32 %v121, 2146121005
  %v130 = vmul.u32 %v122, 2146121005
  %v131 = vmul.u32 %v123, 2146121005
  %v132 = vmul.u32 %v124, 2146121005
  %v133 = vmul.u32 %v125, 2146121005
  %v134 = vmul.u32 %v126, 2146121005
  %v135 = vmul.u32 %v127, 2146121005
  %v136 = vmul.u32 %v128, 2146121005
  %v137 = vshrl.u32 %v129, 15
  %v138 = vshrl.u32 %v130, 15
  %v139 = vshrl.u32 %v131, 15
  %v140 = vshrl.u32 %v132, 15
  %v141 = vshrl.u32 %v133, 15
  %v142 = vshrl.u32 %v134, 15
  %v143 = vshrl.u32 %v135, 15
  %v144 = vshrl.u32 %v136, 15
  %v145 = vxor.u32 %v129, %v137
  %v146 = vxor.u32 %v130, %v138
  %v147 = vxor.u32 %v131, %v139
  %v148 = vxor.u32 %v132, %v140
  %v149 = vxor.u32 %v133, %v141
  %v150 = vxor.u32 %v134, %v142
  %v151 = vxor.u32 %v135, %v143
  %v152 = vxor.u32 %v136, %v144
  %v153 = vmul.u32 %v145, 2221713035
  %v154 = vmul.u32 %v146, 2221713035
  %v155 = vmul.u32 %v147, 2221713035
  %v156 = vmul.u32 %v148, 2221713035
  %v157 = vmul.u32 %v149, 2221713035
  %v158 = vmul.u32 %v150, 2221713035
  %v159 = vmul.u32 %v151, 2221713035
  %v160 = vmul.u32 %v152, 2221713035
  %v161 = vshrl.u32 %v153, 16
  %v162 = vshrl.u32 %v154, 16
  %v163 = vshrl.u32 %v155, 16
  %v164 = vshrl.u32 %v156, 16
  %v165 = vshrl.u32 %v157, 16
  %v166 = vshrl.u32 %v158, 16
  %v167 = vshrl.u32 %v159, 16
  %v168 = vshrl.u32 %v160, 16
  %v169 = vxor.u32 %v153, %v161
  %v170 = vxor.u32 %v154, %v162
  %v171 = vxor.u32 %v155, %v163
  %v172 = vxor.u32 %v156, %v164
  %v173 = vxor.u32 %v157, %v165
  %v174 = vxor.u32 %v158, %v166
  %v175 = vxor.u32 %v159, %v167
  %v176 = vxor.u32 %v160, %v168
  %v177 = vadd.s32 %v32, 1
  %v178 = vadd.s32 %v33, 1
  %v179 = vadd.s32 %v34, 1
  %v180 = vadd.s32 %v35, 1
  %v181 = vadd.s32 %v36, 1
  %v182 = vadd.s32 %v37, 1
  %v183 = vadd.s32 %v38, 1
  %v184 = vadd.s32 %v39, 1
  %v185 = vadd.s32 %v177, %v40
  %v186 = vadd.s32 %v178, %v40
  %v187 = vadd.s32 %v179, %v40
  %v188 = vadd.s32 %v180, %v40
  %v189 = vadd.s32 %v181, %v40
  %v190 = vadd.s32 %v182, %v40
  %v191 = vadd.s32 %v183, %v40
  %v192 = vadd.s32 %v184, %v40
  %v193 = vshrl.u32 %v185, 16
  %v194 = vshrl.u32 %v186, 16
  %v195 = vshrl.u32 %v187, 16
  %v196 = vshrl.u32 %v188, 16
  %v197 = vshrl.u32 %v189, 16
  %v198 = vshrl.u32 %v190, 16
  %v199 = vshrl.u32 %v191, 16
  %v200 = vshrl.u32 %v192, 16
  %v201 = vxor.u32 %v185, %v193
  %v202 = vxor.u32 %v186, %v194
  %v203 = vxor.u32 %v187, %v195
  %v204 = vxor.u32 %v188, %v196
  %v205 = vxor.u32 %v189, %v197
  %v206 = vxor.u32 %v190, %v198
  %v207 = vxor.u32 %v191, %v199
  %v208 = vxor.u32 %v192, %v200
  %v209 = vmul.u32 %v201, 2146121005
  %v210 = vmul.u32 %v202, 2146121005
  %v211 = vmul.u32 %v203, 2146121005
  %v212 = vmul.u32 %v204, 2146121005
  %v213 = vmul.u32 %v205, 2146121005
  %v214 = vmul.u32 %v206, 2146121005
  %v215 = vmul.u32 %v207, 2146121005
  %v216 = vmul.u32 %v208, 2146121005
  %v217 = vshrl.u32 %v209, 15
  %v218 = vshrl.u32 %v210, 15
  %v219 = vshrl.u32 %v211, 15
  %v220 = vshrl.u32 %v212, 15
  %v221 = vshrl.u32 %v213, 15
  %v222 = vshrl.u32 %v214, 15
  %v223 = vshrl.u32 %v215, 15
  %v224 = vshrl.u32 %v216, 15
  %v225 = vxor.u32 %v209, %v217
  %v226 = vxor.u32 %v210, %v218
  %v227 = vxor.u32 %v211, %v219
  %v228 = vxor.u32 %v212, %v220
  %v229 = vxor.u32 %v213, %v221
  %v230 = vxor.u32 %v214, %v222
  %v231 = vxor.u32 %v215, %v223
  %v232 = vxor.u32 %v216, %v224
  %v233 = vmul.u32 %v225, 2221713035
  %v234 = vmul.u32 %v226, 2221713035
  %v235 = vmul.u32 %v227, 2221713035
  %v236 = vmul.u32 %v228, 2221713035
  %v237 = vmul.u32 %v229, 2221713035
  %v238 = vmul.u32 %v230, 2221713035
  %v239 = vmul.u32 %v231, 2221713035
  %v240 = vmul.u32 %v232, 2221713035
  %v241 = vshrl.u32 %v233, 16
  %v242 = vshrl.u32 %v234, 16
  %v243 = vshrl.u32 %v235, 16
  %v244 = vshrl.u32 %v236, 16
  %v245 = vshrl.u32 %v237, 16
  %v246 = vshrl.u32 %v238, 16
  %v247 = vshrl.u32 %v239, 16
  %v248 = vshrl.u32 %v240, 16
  %v249 = vxor.u32 %v233, %v241
  %v250 = vxor.u32 %v234, %v242
  %v251 = vxor.u32 %v235, %v243
  %v252 = vxor.u32 %v236, %v244
  %v253 = vxor.u32 %v237, %v245
  %v254 = vxor.u32 %v238, %v246
  %v255 = vxor.u32 %v239, %v247
  %v256 = vxor.u32 %v240, %v248
  %v257 = vshrl.u32 %v249, 16
  %v258 = vshrl.u32 %v250, 16
  %v259 = vshrl.u32 %v251, 16
  %v260 = vshrl.u32 %v252, 16
  %v261 = vshrl.u32 %v253, 16
  %v262 = vshrl.u32 %v254, 16
  %v263 = vshrl.u32 %v255, 16
  %v264 = vshrl.u32 %v256, 16
  %v265 = vxor.u32 %v249, %v257
  %v266 = vxor.u32 %v250, %v258
  %v267 = vxor.u32 %v251, %v259
  %v268 = vxor.u32 %v252, %v260
  %v269 = vxor.u32 %v253, %v261
  %v270 = vxor.u32 %v254, %v262
  %v271 = vxor.u32 %v255, %v263
  %v272 = vxor.u32 %v256, %v264
  %v273 = vmul.u32 %v265, 2146121005
  %v274 = vmul.u32 %v266, 2146121005
  %v275 = vmul.u32 %v267, 2146121005
  %v276 = vmul.u32 %v268, 2146121005
  %v277 = vmul.u32 %v269, 2146121005
  %v278 = vmul.u32 %v270, 2146121005
  %v279 = vmul.u32 %v271, 2146121005
  %v280 = vmul.u32 %v272, 2146121005
  %v281 = vshrl.u32 %v273, 15
  %v282 = vshrl.u32 %v274, 15
  %v283 = vshrl.u32 %v275, 15
  %v284 = vshrl.u32 %v276, 15
  %v285 = vshrl.u32 %v277, 15
  %v286 = vshrl.u32 %v278, 15
  %v287 = vshrl.u32 %v279, 15
  %v288 = vshrl.u32 %v280, 15
  %v289 = vxor.u32 %v273, %v281
  %v290 = vxor.u32 %v274, %v282
  %v291 = vxor.u32 %v275, %v283
  %v292 = vxor.u32 %v276, %v284
  %v293 = vxor.u32 %v277, %v285
  %v294 = vxor.u32 %v278, %v286
  %v295 = vxor.u32 %v279, %v287
  %v296 = vxor.u32 %v280, %v288
  %v297 = vmul.u32 %v289, 2221713035
  %v298 = vmul.u32 %v290, 2221713035
  %v299 = vmul.u32 %v291, 2221713035
  %v300 = vmul.u32 %v292, 2221713035
  %v301 = vmul.u32 %v293, 2221713035
  %v302 = vmul.u32 %v294, 2221713035
  %v303 = vmul.u32 %v295, 2221713035
  %v304 = vmul.u32 %v296, 2221713035
  %v305 = vshrl.u32 %v297, 16
  %v306 = vshrl.u32 %v298, 16
  %v307 = vshrl.u32 %v299, 16
  %v308 = vshrl.u32 %v300, 16
  %v309 = vshrl.u32 %v301, 16
  %v310 = vshrl.u32 %v302, 16
  %v311 = vshrl.u32 %v303, 16
  %v312 = vshrl.u32 %v304, 16
  %v313 = vxor.u32 %v297, %v305
  %v314 = vxor.u32 %v298, %v306
  %v315 = vxor.u32 %v299, %v307
  %v316 = vxor.u32 %v300, %v308
  %v317 = vxor.u32 %v301, %v309
  %v318 = vxor.u32 %v302, %v310
  %v319 = vxor.u32 %v303, %v311
  %v320 = vxor.u32 %v304, %v312
  %v321 = vshrl.u32 %v169, 9
  %v322 = vshrl.u32 %v170, 9
  %v323 = vshrl.u32 %v171, 9
  %v324 = vshrl.u32 %v172, 9
  %v325 = vshrl.u32 %v173, 9
  %v326 = vshrl.u32 %v174, 9
  %v327 = vshrl.u32 %v175, 9
  %v328 = vshrl.u32 %v176, 9
  %v329 = vor.u32 %v321, 1065353216
  %v330 = vor.u32 %v322, 1065353216
  %v331 = vor.u32 %v323, 1065353216
  %v332 = vor.u32 %v324, 1065353216
  %v333 = vor.u32 %v325, 1065353216
  %v334 = vor.u32 %v326, 1065353216
  %v335 = vor.u32 %v327, 1065353216
  %v336 = vor.u32 %v328, 1065353216
  %v345 = vshrl.u32 %v313, 9
  %v346 = vshrl.u32 %v314, 9
  %v347 = vshrl.u32 %v315, 9
  %v348 = vshrl.u32 %v316, 9
  %v349 = vshrl.u32 %v317, 9
  %v350 = vshrl.u32 %v318, 9
  %v351 = vshrl.u32 %v319, 9
  %v352 = vshrl.u32 %v320, 9
  %v353 = vor.u32 %v345, 1065353216
  %v354 = vor.u32 %v346, 1065353216
  %v355 = vor.u32 %v347, 1065353216
  %v356 = vor.u32 %v348, 1065353216
  %v357 = vor.u32 %v349, 1065353216
  %v358 = vor.u32 %v350, 1065353216
  %v359 = vor.u32 %v351, 1065353216
  %v360 = vor.u32 %v352, 1065353216
  %v369 = vsub.f32 2.0, %v329
  %v370 = vsub.f32 2.0, %v330
  %v371 = vsub.f32 2.0, %v331
  %v372 = vsub.f32 2.0, %v332
  %v373 = vsub.f32 2.0, %v333
  %v374 = vsub.f32 2.0, %v334
  %v375 = vsub.f32 2.0, %v335
  %v376 = vsub.f32 2.0, %v336
  %v377 = vsub.f32 %v353, 1.0
  %v378 = vsub.f32 %v354, 1.0
  %v379 = vsub.f32 %v355, 1.0
  %v380 = vsub.f32 %v356, 1.0
  %v381 = vsub.f32 %v357, 1.0
  %v382 = vsub.f32 %v358, 1.0
  %v383 = vsub.f32 %v359, 1.0
  %v384 = vsub.f32 %v360, 1.0
  %v385 = vlog2.pop %v369
  %v386 = vmul.f32 %v385, 0.6931472
  %v387 = vlog2.pop %v370
  %v388 = vmul.f32 %v387, 0.6931472
  %v389 = vlog2.pop %v371
  %v390 = vmul.f32 %v389, 0.6931472
  %v391 = vlog2.pop %v372
  %v392 = vmul.f32 %v391, 0.6931472
  %v393 = vlog2.pop %v373
  %v394 = vmul.f32 %v393, 0.6931472
  %v395 = vlog2.pop %v374
  %v396 = vmul.f32 %v395, 0.6931472
  %v397 = vlog2.pop %v375
  %v398 = vmul.f32 %v397, 0.6931472
  %v399 = vlog2.pop %v376
  %v400 = vmul.f32 %v399, 0.6931472
  %v401 = vmul.f32 %v386, -2.0
  %v402 = vmul.f32 %v388, -2.0
  %v403 = vmul.f32 %v390, -2.0
  %v404 = vmul.f32 %v392, -2.0
  %v405 = vmul.f32 %v394, -2.0
  %v406 = vmul.f32 %v396, -2.0
  %v407 = vmul.f32 %v398, -2.0
  %v408 = vmul.f32 %v400, -2.0
  %v409 = vrsqrt.pop %v401
  %v410 = vmul.f32 %v409, %v401
  %v411 = vmul.f32 %v410, %v409
  %v412 = vmul.f32 0.5, %v411
  %v413 = vsub.f32 1.5, %v412
  %v414 = vmul.f32 %v409, %v413
  %v415 = vmul.f32 %v401, %v414
  %vm416 = vcmp.eq.f32.partialorder %v401, inf
  %v417 = vsel %vm416, %v401, %v415
  %vm418 = vcmp.eq.f32.partialorder %v401, 0.0
  %v419 = vand.u32 %v401, 2147483648
  %v420 = vsel %vm418, %v419, %v417
  %v421 = vrsqrt.pop %v402
  %v422 = vmul.f32 %v421, %v402
  %v423 = vmul.f32 %v422, %v421
  %v424 = vmul.f32 0.5, %v423
  %v425 = vsub.f32 1.5, %v424
  %v426 = vmul.f32 %v421, %v425
  %v427 = vmul.f32 %v402, %v426
  %vm428 = vcmp.eq.f32.partialorder %v402, inf
  %v429 = vsel %vm428, %v402, %v427
  %vm430 = vcmp.eq.f32.partialorder %v402, 0.0
  %v431 = vand.u32 %v402, 2147483648
  %v432 = vsel %vm430, %v431, %v429
  %v433 = vrsqrt.pop %v403
  %v434 = vmul.f32 %v433, %v403
  %v435 = vmul.f32 %v434, %v433
  %v436 = vmul.f32 0.5, %v435
  %v437 = vsub.f32 1.5, %v436
  %v438 = vmul.f32 %v433, %v437
  %v439 = vmul.f32 %v403, %v438
  %vm440 = vcmp.eq.f32.partialorder %v403, inf
  %v441 = vsel %vm440, %v403, %v439
  %vm442 = vcmp.eq.f32.partialorder %v403, 0.0
  %v443 = vand.u32 %v403, 2147483648
  %v444 = vsel %vm442, %v443, %v441
  %v445 = vrsqrt.pop %v404
  %v446 = vmul.f32 %v445, %v404
  %v447 = vmul.f32 %v446, %v445
  %v448 = vmul.f32 0.5, %v447
  %v449 = vsub.f32 1.5, %v448
  %v450 = vmul.f32 %v445, %v449
  %v451 = vmul.f32 %v404, %v450
  %vm452 = vcmp.eq.f32.partialorder %v404, inf
  %v453 = vsel %vm452, %v404, %v451
  %vm454 = vcmp.eq.f32.partialorder %v404, 0.0
  %v455 = vand.u32 %v404, 2147483648
  %v456 = vsel %vm454, %v455, %v453
  %v457 = vrsqrt.pop %v405
  %v458 = vmul.f32 %v457, %v405
  %v459 = vmul.f32 %v458, %v457
  %v460 = vmul.f32 0.5, %v459
  %v461 = vsub.f32 1.5, %v460
  %v462 = vmul.f32 %v457, %v461
  %v463 = vmul.f32 %v405, %v462
  %vm464 = vcmp.eq.f32.partialorder %v405, inf
  %v465 = vsel %vm464, %v405, %v463
  %vm466 = vcmp.eq.f32.partialorder %v405, 0.0
  %v467 = vand.u32 %v405, 2147483648
  %v468 = vsel %vm466, %v467, %v465
  %v469 = vrsqrt.pop %v406
  %v470 = vmul.f32 %v469, %v406
  %v471 = vmul.f32 %v470, %v469
  %v472 = vmul.f32 0.5, %v471
  %v473 = vsub.f32 1.5, %v472
  %v474 = vmul.f32 %v469, %v473
  %v475 = vmul.f32 %v406, %v474
  %vm476 = vcmp.eq.f32.partialorder %v406, inf
  %v477 = vsel %vm476, %v406, %v475
  %vm478 = vcmp.eq.f32.partialorder %v406, 0.0
  %v479 = vand.u32 %v406, 2147483648
  %v480 = vsel %vm478, %v479, %v477
  %v481 = vrsqrt.pop %v407
  %v482 = vmul.f32 %v481, %v407
  %v483 = vmul.f32 %v482, %v481
  %v484 = vmul.f32 0.5, %v483
  %v485 = vsub.f32 1.5, %v484
  %v486 = vmul.f32 %v481, %v485
  %v487 = vmul.f32 %v407, %v486
  %vm488 = vcmp.eq.f32.partialorder %v407, inf
  %v489 = vsel %vm488, %v407, %v487
  %vm490 = vcmp.eq.f32.partialorder %v407, 0.0
  %v491 = vand.u32 %v407, 2147483648
  %v492 = vsel %vm490, %v491, %v489
  %v493 = vrsqrt.pop %v408
  %v494 = vmul.f32 %v493, %v408
  %v495 = vmul.f32 %v494, %v493
  %v496 = vmul.f32 0.5, %v495
  %v497 = vsub.f32 1.5, %v496
  %v498 = vmul.f32 %v493, %v497
  %v499 = vmul.f32 %v408, %v498
  %vm500 = vcmp.eq.f32.partialorder %v408, inf
  %v501 = vsel %vm500, %v408, %v499
  %vm502 = vcmp.eq.f32.partialorder %v408, 0.0
  %v503 = vand.u32 %v408, 2147483648
  %v504 = vsel %vm502, %v503, %v501
  %v505 = vmul.f32 %v377, 6.2831855
  %v506 = vmul.f32 %v378, 6.2831855
  %v507 = vmul.f32 %v379, 6.2831855
  %v508 = vmul.f32 %v380, 6.2831855
  %v509 = vmul.f32 %v381, 6.2831855
  %v510 = vmul.f32 %v382, 6.2831855
  %v511 = vmul.f32 %v383, 6.2831855
  %v512 = vmul.f32 %v384, 6.2831855
  %v513 = vand.u32 2147483647, %v505
  %vm514 = vcmp.le.f32.partialorder %v513, 0.7853982
  %vm515 = vcmp.lt.s32.totalorder %v505, 0
  %v516 = vand.u32 %v505, 2139095040
  %v517 = vshrl.u32 %v516, 23
  %v518 = vsub.s32 %v517, 127
  %v519 = vand.u32 2147483647, %v505
  %v520 = vand.u32 %v519, 8388607
  %v521 = vor.u32 %v520, 8388608
  %v522 = vsub.s32 0, %v521
  %v523 = vadd.s32 %v518, 1
  %vm524 = vcmp.gt.s32.totalorder %v523, 0
  %v525 = vsel %vm524, %v523, 0
  %v526 = vshrl.u32 %v525, 5
  %v527 = vand.u32 %v525, 31
  %v528 = vsub.s32 32, %v527
  %v529 = vshrl.u32 683565275, %v528
  %v530 = vshll.u32 683565275, %v527
  %v531 = vshrl.u32 2475754826, %v528
  %v532 = vor.u32 %v530, %v531
  %v533 = vshll.u32 2475754826, %v527
  %v534 = vshrl.u32 2131351028, %v528
  %v535 = vor.u32 %v533, %v534
  %v536 = vshll.u32 2131351028, %v527
  %v537 = vshrl.u32 2102212464, %v528
  %v538 = vor.u32 %v536, %v537
  %v539 = vshll.u32 2102212464, %v527
  %v540 = vshrl.u32 920167782, %v528
  %v541 = vor.u32 %v539, %v540
  %v542 = vshll.u32 920167782, %v527
  %v543 = vshrl.u32 1326507024, %v528
  %v544 = vor.u32 %v542, %v543
  %vm545 = vcmp.lt.s32.totalorder %v526, 1
  %vm546 = vcmp.lt.s32.totalorder %v526, 2
  %vm547 = vcmp.lt.s32.totalorder %v526, 3
  %vm548 = vcmp.lt.s32.totalorder %v526, 4
  %v549 = vsel %vm545, %v529, %v532
  %v550 = vsel %vm548, %v538, 2102212464
  %v551 = vsel %vm547, %v535, %v550
  %v552 = vsel %vm546, %v549, %v551
  %v553 = vsel %vm545, %v532, %v535
  %v554 = vsel %vm548, %v541, 920167782
  %v555 = vsel %vm547, %v538, %v554
  %v556 = vsel %vm546, %v553, %v555
  %v557 = vsel %vm545, %v535, %v538
  %v558 = vsel %vm548, %v544, 1326507024
  %v559 = vsel %vm547, %v541, %v558
  %v560 = vsel %vm546, %v557, %v559
  %v561 = vshll.u32 %v521, 8
  %v562 = vand.u32 %v561, 65535
  %v563 = vshrl.u32 %v561, 16
  %v564 = vand.u32 %v560, 65535
  %v565 = vshrl.u32 %v560, 16
  %v566 = vmul.u32 %v562, %v564
  %v567 = vmul.u32 %v562, %v565
  %v568 = vmul.u32 %v563, %v564
  %v569 = vmul.u32 %v563, %v565
  %v570 = vshll.u32 %v567, 16
  %v571 = vshrl.u32 %v567, 16
  %v572 = vshll.u32 %v568, 16
  %v573 = vshrl.u32 %v568, 16
  %vm574 = vc.u32 %v566, %v570
  %v575 = vsel %vm574, 1, 0
  %v576 = vadd.s32 %v566, %v570
  %v577 = vadd.s32 %v569, %v575
  %vm578 = vc.u32 %v576, %v572
  %v579 = vsel %vm578, 1, 0
  %v580 = vadd.s32 %v576, %v572
  %v581 = vadd.s32 %v577, %v579
  %v582 = vadd.s32 %v581, %v571
  %v583 = vadd.s32 %v582, %v573
  %v584 = vand.u32 %v561, 65535
  %v585 = vshrl.u32 %v561, 16
  %v586 = vand.u32 %v556, 65535
  %v587 = vshrl.u32 %v556, 16
  %v588 = vmul.u32 %v584, %v586
  %v589 = vmul.u32 %v584, %v587
  %v590 = vmul.u32 %v585, %v586
  %v591 = vmul.u32 %v585, %v587
  %v592 = vshll.u32 %v589, 16
  %v593 = vshrl.u32 %v589, 16
  %v594 = vshll.u32 %v590, 16
  %v595 = vshrl.u32 %v590, 16
  %vm596 = vc.u32 %v588, %v592
  %v597 = vsel %vm596, 1, 0
  %v598 = vadd.s32 %v588, %v592
  %v599 = vadd.s32 %v591, %v597
  %vm600 = vc.u32 %v598, %v594
  %v601 = vsel %vm600, 1, 0
  %v602 = vadd.s32 %v598, %v594
  %v603 = vadd.s32 %v599, %v601
  %v604 = vadd.s32 %v603, %v593
  %v605 = vadd.s32 %v604, %v595
  %v606 = vmul.u32 %v561, %v552
  %v607 = vadd.s32 %v583, %v602
  %vm608 = vc.u32 %v583, %v602
  %v609 = vadd.s32 %v605, 1
  %v610 = vsel %vm608, %v609, %v605
  %v611 = vadd.s32 %v606, %v610
  %v612 = vadd.s32 %v611, 536870912
  %v613 = vshrl.u32 %v612, 30
  %v614 = vshll.u32 %v613, 30
  %v615 = vsub.s32 %v611, %v614
  %vm616 = vcmp.lt.s32.totalorder %v615, 0
  %v617 = vsub.s32 0, %v615
  %v618 = vsel %vm616, %v617, %v615
  %v619 = vclz %v618
  %v620 = vsub.s32 %v619, 2
  %vm621 = vcmp.gt.s32.totalorder 0, %v620
  %v622 = vsel %vm621, 0, %v620
  %v623 = vsub.s32 32, %v622
  %v624 = vshll.u32 %v615, %v622
  %v625 = vshrl.u32 %v607, %v623
  %v626 = vor.u32 %v624, %v625
  %v627 = vsub.s32 4294967266, %v622
  %v628 = vadd.s32 %v627, 127
  %v629 = vshll.u32 %v628, 23
  %v630 = vor.u32 4788187, %v629
  %v631 = vand.u32 2147483647, %v630
  %v633 = vcvt.s32.f32 %v626
  %v634 = vmul.f32 %v633, %v631
  %v635 = vxor.u32 %v634, 2147483648
  %v636 = vsel %vm515, %v635, %v634
  %v637 = vsub.s32 4, %v613
  %v638 = vsel %vm515, %v637, %v613
  %v639 = vsel %vm514, %v505, %v636
  %v640 = vsel %vm514, 0, %v638
  %v641 = vmul.f32 %v639, %v639
  %v642 = vmul.f32 %v641, -0.001358992
  %v643 = vadd.f32 %v642, 0.041655596
  %v644 = vmul.f32 %v641, %v643
  %v645 = vadd.f32 %v644, -0.4999988
  %v646 = vmul.f32 %v641, %v645
  %v647 = vadd.f32 1.0, %v646
  %v648 = vmul.f32 %v639, %v639
  %v649 = vmul.f32 %v648, -0.00019511016
  %v650 = vadd.f32 %v649, 0.008332121
  %v651 = vmul.f32 %v648, %v650
  %v652 = vadd.f32 %v651, -0.16666654
  %v653 = vmul.f32 %v648, %v652
  %v654 = vadd.f32 %v653, 1.0
  %v655 = vmul.f32 %v654, %v639
  %vm656 = vweird.f32 %v505
  %v657 = vand.u32 %v640, 3
  %vm658 = vcmp.lt.s32.totalorder %v657, 2
  %vm659 = vcmp.eq.s32.totalorder %v657, 0
  %v660 = vxor.u32 %v655, 2147483648
  %v661 = vsel %vm659, %v647, %v660
  %vm662 = vcmp.eq.s32.totalorder %v657, 2
  %v663 = vxor.u32 %v647, 2147483648
  %v664 = vsel %vm662, %v663, %v655
  %v665 = vsel %vm658, %v661, %v664
  %v666 = vsel %vm656, nan, %v665
  %v667 = vand.u32 2147483647, %v506
  %vm668 = vcmp.le.f32.partialorder %v667, 0.7853982
  %vm669 = vcmp.lt.s32.totalorder %v506, 0
  %v670 = vand.u32 %v506, 2139095040
  %v671 = vshrl.u32 %v670, 23
  %v672 = vsub.s32 %v671, 127
  %v673 = vand.u32 2147483647, %v506
  %v674 = vand.u32 %v673, 8388607
  %v675 = vor.u32 %v674, 8388608
  %v676 = vsub.s32 0, %v675
  %v677 = vadd.s32 %v672, 1
  %vm678 = vcmp.gt.s32.totalorder %v677, 0
  %v679 = vsel %vm678, %v677, 0
  %v680 = vshrl.u32 %v679, 5
  %v681 = vand.u32 %v679, 31
  %v682 = vsub.s32 32, %v681
  %v683 = vshrl.u32 683565275, %v682
  %v684 = vshll.u32 683565275, %v681
  %v685 = vshrl.u32 2475754826, %v682
  %v686 = vor.u32 %v684, %v685
  %v687 = vshll.u32 2475754826, %v681
  %v688 = vshrl.u32 2131351028, %v682
  %v689 = vor.u32 %v687, %v688
  %v690 = vshll.u32 2131351028, %v681
  %v691 = vshrl.u32 2102212464, %v682
  %v692 = vor.u32 %v690, %v691
  %v693 = vshll.u32 2102212464, %v681
  %v694 = vshrl.u32 920167782, %v682
  %v695 = vor.u32 %v693, %v694
  %v696 = vshll.u32 920167782, %v681
  %v697 = vshrl.u32 1326507024, %v682
  %v698 = vor.u32 %v696, %v697
  %vm699 = vcmp.lt.s32.totalorder %v680, 1
  %vm700 = vcmp.lt.s32.totalorder %v680, 2
  %vm701 = vcmp.lt.s32.totalorder %v680, 3
  %vm702 = vcmp.lt.s32.totalorder %v680, 4
  %v703 = vsel %vm699, %v683, %v686
  %v704 = vsel %vm702, %v692, 2102212464
  %v705 = vsel %vm701, %v689, %v704
  %v706 = vsel %vm700, %v703, %v705
  %v707 = vsel %vm699, %v686, %v689
  %v708 = vsel %vm702, %v695, 920167782
  %v709 = vsel %vm701, %v692, %v708
  %v710 = vsel %vm700, %v707, %v709
  %v711 = vsel %vm699, %v689, %v692
  %v712 = vsel %vm702, %v698, 1326507024
  %v713 = vsel %vm701, %v695, %v712
  %v714 = vsel %vm700, %v711, %v713
  %v715 = vshll.u32 %v675, 8
  %v716 = vand.u32 %v715, 65535
  %v717 = vshrl.u32 %v715, 16
  %v718 = vand.u32 %v714, 65535
  %v719 = vshrl.u32 %v714, 16
  %v720 = vmul.u32 %v716, %v718
  %v721 = vmul.u32 %v716, %v719
  %v722 = vmul.u32 %v717, %v718
  %v723 = vmul.u32 %v717, %v719
  %v724 = vshll.u32 %v721, 16
  %v725 = vshrl.u32 %v721, 16
  %v726 = vshll.u32 %v722, 16
  %v727 = vshrl.u32 %v722, 16
  %vm728 = vc.u32 %v720, %v724
  %v729 = vsel %vm728, 1, 0
  %v730 = vadd.s32 %v720, %v724
  %v731 = vadd.s32 %v723, %v729
  %vm732 = vc.u32 %v730, %v726
  %v733 = vsel %vm732, 1, 0
  %v734 = vadd.s32 %v730, %v726
  %v735 = vadd.s32 %v731, %v733
  %v736 = vadd.s32 %v735, %v725
  %v737 = vadd.s32 %v736, %v727
  %v738 = vand.u32 %v715, 65535
  %v739 = vshrl.u32 %v715, 16
  %v740 = vand.u32 %v710, 65535
  %v741 = vshrl.u32 %v710, 16
  %v742 = vmul.u32 %v738, %v740
  %v743 = vmul.u32 %v738, %v741
  %v744 = vmul.u32 %v739, %v740
  %v745 = vmul.u32 %v739, %v741
  %v746 = vshll.u32 %v743, 16
  %v747 = vshrl.u32 %v743, 16
  %v748 = vshll.u32 %v744, 16
  %v749 = vshrl.u32 %v744, 16
  %vm750 = vc.u32 %v742, %v746
  %v751 = vsel %vm750, 1, 0
  %v752 = vadd.s32 %v742, %v746
  %v753 = vadd.s32 %v745, %v751
  %vm754 = vc.u32 %v752, %v748
  %v755 = vsel %vm754, 1, 0
  %v756 = vadd.s32 %v752, %v748
  %v757 = vadd.s32 %v753, %v755
  %v758 = vadd.s32 %v757, %v747
  %v759 = vadd.s32 %v758, %v749
  %v760 = vmul.u32 %v715, %v706
  %v761 = vadd.s32 %v737, %v756
  %vm762 = vc.u32 %v737, %v756
  %v763 = vadd.s32 %v759, 1
  %v764 = vsel %vm762, %v763, %v759
  %v765 = vadd.s32 %v760, %v764
  %v766 = vadd.s32 %v765, 536870912
  %v767 = vshrl.u32 %v766, 30
  %v768 = vshll.u32 %v767, 30
  %v769 = vsub.s32 %v765, %v768
  %vm770 = vcmp.lt.s32.totalorder %v769, 0
  %v771 = vsub.s32 0, %v769
  %v772 = vsel %vm770, %v771, %v769
  %v773 = vclz %v772
  %v774 = vsub.s32 %v773, 2
  %vm775 = vcmp.gt.s32.totalorder 0, %v774
  %v776 = vsel %vm775, 0, %v774
  %v777 = vsub.s32 32, %v776
  %v778 = vshll.u32 %v769, %v776
  %v779 = vshrl.u32 %v761, %v777
  %v780 = vor.u32 %v778, %v779
  %v781 = vsub.s32 4294967266, %v776
  %v782 = vadd.s32 %v781, 127
  %v783 = vshll.u32 %v782, 23
  %v784 = vor.u32 4788187, %v783
  %v785 = vand.u32 2147483647, %v784
  %v787 = vcvt.s32.f32 %v780
  %v788 = vmul.f32 %v787, %v785
  %v789 = vxor.u32 %v788, 2147483648
  %v790 = vsel %vm669, %v789, %v788
  %v791 = vsub.s32 4, %v767
  %v792 = vsel %vm669, %v791, %v767
  %v793 = vsel %vm668, %v506, %v790
  %v794 = vsel %vm668, 0, %v792
  %v795 = vmul.f32 %v793, %v793
  %v796 = vmul.f32 %v795, -0.001358992
  %v797 = vadd.f32 %v796, 0.041655596
  %v798 = vmul.f32 %v795, %v797
  %v799 = vadd.f32 %v798, -0.4999988
  %v800 = vmul.f32 %v795, %v799
  %v801 = vadd.f32 1.0, %v800
  %v802 = vmul.f32 %v793, %v793
  %v803 = vmul.f32 %v802, -0.00019511016
  %v804 = vadd.f32 %v803, 0.008332121
  %v805 = vmul.f32 %v802, %v804
  %v806 = vadd.f32 %v805, -0.16666654
  %v807 = vmul.f32 %v802, %v806
  %v808 = vadd.f32 %v807, 1.0
  %v809 = vmul.f32 %v808, %v793
  %vm810 = vweird.f32 %v506
  %v811 = vand.u32 %v794, 3
  %vm812 = vcmp.lt.s32.totalorder %v811, 2
  %vm813 = vcmp.eq.s32.totalorder %v811, 0
  %v814 = vxor.u32 %v809, 2147483648
  %v815 = vsel %vm813, %v801, %v814
  %vm816 = vcmp.eq.s32.totalorder %v811, 2
  %v817 = vxor.u32 %v801, 2147483648
  %v818 = vsel %vm816, %v817, %v809
  %v819 = vsel %vm812, %v815, %v818
  %v820 = vsel %vm810, nan, %v819
  %v821 = vand.u32 2147483647, %v507
  %vm822 = vcmp.le.f32.partialorder %v821, 0.7853982
  %vm823 = vcmp.lt.s32.totalorder %v507, 0
  %v824 = vand.u32 %v507, 2139095040
  %v825 = vshrl.u32 %v824, 23
  %v826 = vsub.s32 %v825, 127
  %v827 = vand.u32 2147483647, %v507
  %v828 = vand.u32 %v827, 8388607
  %v829 = vor.u32 %v828, 8388608
  %v830 = vsub.s32 0, %v829
  %v831 = vadd.s32 %v826, 1
  %vm832 = vcmp.gt.s32.totalorder %v831, 0
  %v833 = vsel %vm832, %v831, 0
  %v834 = vshrl.u32 %v833, 5
  %v835 = vand.u32 %v833, 31
  %v836 = vsub.s32 32, %v835
  %v837 = vshrl.u32 683565275, %v836
  %v838 = vshll.u32 683565275, %v835
  %v839 = vshrl.u32 2475754826, %v836
  %v840 = vor.u32 %v838, %v839
  %v841 = vshll.u32 2475754826, %v835
  %v842 = vshrl.u32 2131351028, %v836
  %v843 = vor.u32 %v841, %v842
  %v844 = vshll.u32 2131351028, %v835
  %v845 = vshrl.u32 2102212464, %v836
  %v846 = vor.u32 %v844, %v845
  %v847 = vshll.u32 2102212464, %v835
  %v848 = vshrl.u32 920167782, %v836
  %v849 = vor.u32 %v847, %v848
  %v850 = vshll.u32 920167782, %v835
  %v851 = vshrl.u32 1326507024, %v836
  %v852 = vor.u32 %v850, %v851
  %vm853 = vcmp.lt.s32.totalorder %v834, 1
  %vm854 = vcmp.lt.s32.totalorder %v834, 2
  %vm855 = vcmp.lt.s32.totalorder %v834, 3
  %vm856 = vcmp.lt.s32.totalorder %v834, 4
  %v857 = vsel %vm853, %v837, %v840
  %v858 = vsel %vm856, %v846, 2102212464
  %v859 = vsel %vm855, %v843, %v858
  %v860 = vsel %vm854, %v857, %v859
  %v861 = vsel %vm853, %v840, %v843
  %v862 = vsel %vm856, %v849, 920167782
  %v863 = vsel %vm855, %v846, %v862
  %v864 = vsel %vm854, %v861, %v863
  %v865 = vsel %vm853, %v843, %v846
  %v866 = vsel %vm856, %v852, 1326507024
  %v867 = vsel %vm855, %v849, %v866
  %v868 = vsel %vm854, %v865, %v867
  %v869 = vshll.u32 %v829, 8
  %v870 = vand.u32 %v869, 65535
  %v871 = vshrl.u32 %v869, 16
  %v872 = vand.u32 %v868, 65535
  %v873 = vshrl.u32 %v868, 16
  %v874 = vmul.u32 %v870, %v872
  %v875 = vmul.u32 %v870, %v873
  %v876 = vmul.u32 %v871, %v872
  %v877 = vmul.u32 %v871, %v873
  %v878 = vshll.u32 %v875, 16
  %v879 = vshrl.u32 %v875, 16
  %v880 = vshll.u32 %v876, 16
  %v881 = vshrl.u32 %v876, 16
  %vm882 = vc.u32 %v874, %v878
  %v883 = vsel %vm882, 1, 0
  %v884 = vadd.s32 %v874, %v878
  %v885 = vadd.s32 %v877, %v883
  %vm886 = vc.u32 %v884, %v880
  %v887 = vsel %vm886, 1, 0
  %v888 = vadd.s32 %v884, %v880
  %v889 = vadd.s32 %v885, %v887
  %v890 = vadd.s32 %v889, %v879
  %v891 = vadd.s32 %v890, %v881
  %v892 = vand.u32 %v869, 65535
  %v893 = vshrl.u32 %v869, 16
  %v894 = vand.u32 %v864, 65535
  %v895 = vshrl.u32 %v864, 16
  %v896 = vmul.u32 %v892, %v894
  %v897 = vmul.u32 %v892, %v895
  %v898 = vmul.u32 %v893, %v894
  %v899 = vmul.u32 %v893, %v895
  %v900 = vshll.u32 %v897, 16
  %v901 = vshrl.u32 %v897, 16
  %v902 = vshll.u32 %v898, 16
  %v903 = vshrl.u32 %v898, 16
  %vm904 = vc.u32 %v896, %v900
  %v905 = vsel %vm904, 1, 0
  %v906 = vadd.s32 %v896, %v900
  %v907 = vadd.s32 %v899, %v905
  %vm908 = vc.u32 %v906, %v902
  %v909 = vsel %vm908, 1, 0
  %v910 = vadd.s32 %v906, %v902
  %v911 = vadd.s32 %v907, %v909
  %v912 = vadd.s32 %v911, %v901
  %v913 = vadd.s32 %v912, %v903
  %v914 = vmul.u32 %v869, %v860
  %v915 = vadd.s32 %v891, %v910
  %vm916 = vc.u32 %v891, %v910
  %v917 = vadd.s32 %v913, 1
  %v918 = vsel %vm916, %v917, %v913
  %v919 = vadd.s32 %v914, %v918
  %v920 = vadd.s32 %v919, 536870912
  %v921 = vshrl.u32 %v920, 30
  %v922 = vshll.u32 %v921, 30
  %v923 = vsub.s32 %v919, %v922
  %vm924 = vcmp.lt.s32.totalorder %v923, 0
  %v925 = vsub.s32 0, %v923
  %v926 = vsel %vm924, %v925, %v923
  %v927 = vclz %v926
  %v928 = vsub.s32 %v927, 2
  %vm929 = vcmp.gt.s32.totalorder 0, %v928
  %v930 = vsel %vm929, 0, %v928
  %v931 = vsub.s32 32, %v930
  %v932 = vshll.u32 %v923, %v930
  %v933 = vshrl.u32 %v915, %v931
  %v934 = vor.u32 %v932, %v933
  %v935 = vsub.s32 4294967266, %v930
  %v936 = vadd.s32 %v935, 127
  %v937 = vshll.u32 %v936, 23
  %v938 = vor.u32 4788187, %v937
  %v939 = vand.u32 2147483647, %v938
  %v941 = vcvt.s32.f32 %v934
  %v942 = vmul.f32 %v941, %v939
  %v943 = vxor.u32 %v942, 2147483648
  %v944 = vsel %vm823, %v943, %v942
  %v945 = vsub.s32 4, %v921
  %v946 = vsel %vm823, %v945, %v921
  %v947 = vsel %vm822, %v507, %v944
  %v948 = vsel %vm822, 0, %v946
  %v949 = vmul.f32 %v947, %v947
  %v950 = vmul.f32 %v949, -0.001358992
  %v951 = vadd.f32 %v950, 0.041655596
  %v952 = vmul.f32 %v949, %v951
  %v953 = vadd.f32 %v952, -0.4999988
  %v954 = vmul.f32 %v949, %v953
  %v955 = vadd.f32 1.0, %v954
  %v956 = vmul.f32 %v947, %v947
  %v957 = vmul.f32 %v956, -0.00019511016
  %v958 = vadd.f32 %v957, 0.008332121
  %v959 = vmul.f32 %v956, %v958
  %v960 = vadd.f32 %v959, -0.16666654
  %v961 = vmul.f32 %v956, %v960
  %v962 = vadd.f32 %v961, 1.0
  %v963 = vmul.f32 %v962, %v947
  %vm964 = vweird.f32 %v507
  %v965 = vand.u32 %v948, 3
  %vm966 = vcmp.lt.s32.totalorder %v965, 2
  %vm967 = vcmp.eq.s32.totalorder %v965, 0
  %v968 = vxor.u32 %v963, 2147483648
  %v969 = vsel %vm967, %v955, %v968
  %vm970 = vcmp.eq.s32.totalorder %v965, 2
  %v971 = vxor.u32 %v955, 2147483648
  %v972 = vsel %vm970, %v971, %v963
  %v973 = vsel %vm966, %v969, %v972
  %v974 = vsel %vm964, nan, %v973
  %v975 = vand.u32 2147483647, %v508
  %vm976 = vcmp.le.f32.partialorder %v975, 0.7853982
  %vm977 = vcmp.lt.s32.totalorder %v508, 0
  %v978 = vand.u32 %v508, 2139095040
  %v979 = vshrl.u32 %v978, 23
  %v980 = vsub.s32 %v979, 127
  %v981 = vand.u32 2147483647, %v508
  %v982 = vand.u32 %v981, 8388607
  %v983 = vor.u32 %v982, 8388608
  %v984 = vsub.s32 0, %v983
  %v985 = vadd.s32 %v980, 1
  %vm986 = vcmp.gt.s32.totalorder %v985, 0
  %v987 = vsel %vm986, %v985, 0
  %v988 = vshrl.u32 %v987, 5
  %v989 = vand.u32 %v987, 31
  %v990 = vsub.s32 32, %v989
  %v991 = vshrl.u32 683565275, %v990
  %v992 = vshll.u32 683565275, %v989
  %v993 = vshrl.u32 2475754826, %v990
  %v994 = vor.u32 %v992, %v993
  %v995 = vshll.u32 2475754826, %v989
  %v996 = vshrl.u32 2131351028, %v990
  %v997 = vor.u32 %v995, %v996
  %v998 = vshll.u32 2131351028, %v989
  %v999 = vshrl.u32 2102212464, %v990
  %v1000 = vor.u32 %v998, %v999
  %v1001 = vshll.u32 2102212464, %v989
  %v1002 = vshrl.u32 920167782, %v990
  %v1003 = vor.u32 %v1001, %v1002
  %v1004 = vshll.u32 920167782, %v989
  %v1005 = vshrl.u32 1326507024, %v990
  %v1006 = vor.u32 %v1004, %v1005
  %vm1007 = vcmp.lt.s32.totalorder %v988, 1
  %vm1008 = vcmp.lt.s32.totalorder %v988, 2
  %vm1009 = vcmp.lt.s32.totalorder %v988, 3
  %vm1010 = vcmp.lt.s32.totalorder %v988, 4
  %v1011 = vsel %vm1007, %v991, %v994
  %v1012 = vsel %vm1010, %v1000, 2102212464
  %v1013 = vsel %vm1009, %v997, %v1012
  %v1014 = vsel %vm1008, %v1011, %v1013
  %v1015 = vsel %vm1007, %v994, %v997
  %v1016 = vsel %vm1010, %v1003, 920167782
  %v1017 = vsel %vm1009, %v1000, %v1016
  %v1018 = vsel %vm1008, %v1015, %v1017
  %v1019 = vsel %vm1007, %v997, %v1000
  %v1020 = vsel %vm1010, %v1006, 1326507024
  %v1021 = vsel %vm1009, %v1003, %v1020
  %v1022 = vsel %vm1008, %v1019, %v1021
  %v1023 = vshll.u32 %v983, 8
  %v1024 = vand.u32 %v1023, 65535
  %v1025 = vshrl.u32 %v1023, 16
  %v1026 = vand.u32 %v1022, 65535
  %v1027 = vshrl.u32 %v1022, 16
  %v1028 = vmul.u32 %v1024, %v1026
  %v1029 = vmul.u32 %v1024, %v1027
  %v1030 = vmul.u32 %v1025, %v1026
  %v1031 = vmul.u32 %v1025, %v1027
  %v1032 = vshll.u32 %v1029, 16
  %v1033 = vshrl.u32 %v1029, 16
  %v1034 = vshll.u32 %v1030, 16
  %v1035 = vshrl.u32 %v1030, 16
  %vm1036 = vc.u32 %v1028, %v1032
  %v1037 = vsel %vm1036, 1, 0
  %v1038 = vadd.s32 %v1028, %v1032
  %v1039 = vadd.s32 %v1031, %v1037
  %vm1040 = vc.u32 %v1038, %v1034
  %v1041 = vsel %vm1040, 1, 0
  %v1042 = vadd.s32 %v1038, %v1034
  %v1043 = vadd.s32 %v1039, %v1041
  %v1044 = vadd.s32 %v1043, %v1033
  %v1045 = vadd.s32 %v1044, %v1035
  %v1046 = vand.u32 %v1023, 65535
  %v1047 = vshrl.u32 %v1023, 16
  %v1048 = vand.u32 %v1018, 65535
  %v1049 = vshrl.u32 %v1018, 16
  %v1050 = vmul.u32 %v1046, %v1048
  %v1051 = vmul.u32 %v1046, %v1049
  %v1052 = vmul.u32 %v1047, %v1048
  %v1053 = vmul.u32 %v1047, %v1049
  %v1054 = vshll.u32 %v1051, 16
  %v1055 = vshrl.u32 %v1051, 16
  %v1056 = vshll.u32 %v1052, 16
  %v1057 = vshrl.u32 %v1052, 16
  %vm1058 = vc.u32 %v1050, %v1054
  %v1059 = vsel %vm1058, 1, 0
  %v1060 = vadd.s32 %v1050, %v1054
  %v1061 = vadd.s32 %v1053, %v1059
  %vm1062 = vc.u32 %v1060, %v1056
  %v1063 = vsel %vm1062, 1, 0
  %v1064 = vadd.s32 %v1060, %v1056
  %v1065 = vadd.s32 %v1061, %v1063
  %v1066 = vadd.s32 %v1065, %v1055
  %v1067 = vadd.s32 %v1066, %v1057
  %v1068 = vmul.u32 %v1023, %v1014
  %v1069 = vadd.s32 %v1045, %v1064
  %vm1070 = vc.u32 %v1045, %v1064
  %v1071 = vadd.s32 %v1067, 1
  %v1072 = vsel %vm1070, %v1071, %v1067
  %v1073 = vadd.s32 %v1068, %v1072
  %v1074 = vadd.s32 %v1073, 536870912
  %v1075 = vshrl.u32 %v1074, 30
  %v1076 = vshll.u32 %v1075, 30
  %v1077 = vsub.s32 %v1073, %v1076
  %vm1078 = vcmp.lt.s32.totalorder %v1077, 0
  %v1079 = vsub.s32 0, %v1077
  %v1080 = vsel %vm1078, %v1079, %v1077
  %v1081 = vclz %v1080
  %v1082 = vsub.s32 %v1081, 2
  %vm1083 = vcmp.gt.s32.totalorder 0, %v1082
  %v1084 = vsel %vm1083, 0, %v1082
  %v1085 = vsub.s32 32, %v1084
  %v1086 = vshll.u32 %v1077, %v1084
  %v1087 = vshrl.u32 %v1069, %v1085
  %v1088 = vor.u32 %v1086, %v1087
  %v1089 = vsub.s32 4294967266, %v1084
  %v1090 = vadd.s32 %v1089, 127
  %v1091 = vshll.u32 %v1090, 23
  %v1092 = vor.u32 4788187, %v1091
  %v1093 = vand.u32 2147483647, %v1092
  %v1095 = vcvt.s32.f32 %v1088
  %v1096 = vmul.f32 %v1095, %v1093
  %v1097 = vxor.u32 %v1096, 2147483648
  %v1098 = vsel %vm977, %v1097, %v1096
  %v1099 = vsub.s32 4, %v1075
  %v1100 = vsel %vm977, %v1099, %v1075
  %v1101 = vsel %vm976, %v508, %v1098
  %v1102 = vsel %vm976, 0, %v1100
  %v1103 = vmul.f32 %v1101, %v1101
  %v1104 = vmul.f32 %v1103, -0.001358992
  %v1105 = vadd.f32 %v1104, 0.041655596
  %v1106 = vmul.f32 %v1103, %v1105
  %v1107 = vadd.f32 %v1106, -0.4999988
  %v1108 = vmul.f32 %v1103, %v1107
  %v1109 = vadd.f32 1.0, %v1108
  %v1110 = vmul.f32 %v1101, %v1101
  %v1111 = vmul.f32 %v1110, -0.00019511016
  %v1112 = vadd.f32 %v1111, 0.008332121
  %v1113 = vmul.f32 %v1110, %v1112
  %v1114 = vadd.f32 %v1113, -0.16666654
  %v1115 = vmul.f32 %v1110, %v1114
  %v1116 = vadd.f32 %v1115, 1.0
  %v1117 = vmul.f32 %v1116, %v1101
  %vm1118 = vweird.f32 %v508
  %v1119 = vand.u32 %v1102, 3
  %vm1120 = vcmp.lt.s32.totalorder %v1119, 2
  %vm1121 = vcmp.eq.s32.totalorder %v1119, 0
  %v1122 = vxor.u32 %v1117, 2147483648
  %v1123 = vsel %vm1121, %v1109, %v1122
  %vm1124 = vcmp.eq.s32.totalorder %v1119, 2
  %v1125 = vxor.u32 %v1109, 2147483648
  %v1126 = vsel %vm1124, %v1125, %v1117
  %v1127 = vsel %vm1120, %v1123, %v1126
  %v1128 = vsel %vm1118, nan, %v1127
  %v1129 = vand.u32 2147483647, %v509
  %vm1130 = vcmp.le.f32.partialorder %v1129, 0.7853982
  %vm1131 = vcmp.lt.s32.totalorder %v509, 0
  %v1132 = vand.u32 %v509, 2139095040
  %v1133 = vshrl.u32 %v1132, 23
  %v1134 = vsub.s32 %v1133, 127
  %v1135 = vand.u32 2147483647, %v509
  %v1136 = vand.u32 %v1135, 8388607
  %v1137 = vor.u32 %v1136, 8388608
  %v1138 = vsub.s32 0, %v1137
  %v1139 = vadd.s32 %v1134, 1
  %vm1140 = vcmp.gt.s32.totalorder %v1139, 0
  %v1141 = vsel %vm1140, %v1139, 0
  %v1142 = vshrl.u32 %v1141, 5
  %v1143 = vand.u32 %v1141, 31
  %v1144 = vsub.s32 32, %v1143
  %v1145 = vshrl.u32 683565275, %v1144
  %v1146 = vshll.u32 683565275, %v1143
  %v1147 = vshrl.u32 2475754826, %v1144
  %v1148 = vor.u32 %v1146, %v1147
  %v1149 = vshll.u32 2475754826, %v1143
  %v1150 = vshrl.u32 2131351028, %v1144
  %v1151 = vor.u32 %v1149, %v1150
  %v1152 = vshll.u32 2131351028, %v1143
  %v1153 = vshrl.u32 2102212464, %v1144
  %v1154 = vor.u32 %v1152, %v1153
  %v1155 = vshll.u32 2102212464, %v1143
  %v1156 = vshrl.u32 920167782, %v1144
  %v1157 = vor.u32 %v1155, %v1156
  %v1158 = vshll.u32 920167782, %v1143
  %v1159 = vshrl.u32 1326507024, %v1144
  %v1160 = vor.u32 %v1158, %v1159
  %vm1161 = vcmp.lt.s32.totalorder %v1142, 1
  %vm1162 = vcmp.lt.s32.totalorder %v1142, 2
  %vm1163 = vcmp.lt.s32.totalorder %v1142, 3
  %vm1164 = vcmp.lt.s32.totalorder %v1142, 4
  %v1165 = vsel %vm1161, %v1145, %v1148
  %v1166 = vsel %vm1164, %v1154, 2102212464
  %v1167 = vsel %vm1163, %v1151, %v1166
  %v1168 = vsel %vm1162, %v1165, %v1167
  %v1169 = vsel %vm1161, %v1148, %v1151
  %v1170 = vsel %vm1164, %v1157, 920167782
  %v1171 = vsel %vm1163, %v1154, %v1170
  %v1172 = vsel %vm1162, %v1169, %v1171
  %v1173 = vsel %vm1161, %v1151, %v1154
  %v1174 = vsel %vm1164, %v1160, 1326507024
  %v1175 = vsel %vm1163, %v1157, %v1174
  %v1176 = vsel %vm1162, %v1173, %v1175
  %v1177 = vshll.u32 %v1137, 8
  %v1178 = vand.u32 %v1177, 65535
  %v1179 = vshrl.u32 %v1177, 16
  %v1180 = vand.u32 %v1176, 65535
  %v1181 = vshrl.u32 %v1176, 16
  %v1182 = vmul.u32 %v1178, %v1180
  %v1183 = vmul.u32 %v1178, %v1181
  %v1184 = vmul.u32 %v1179, %v1180
  %v1185 = vmul.u32 %v1179, %v1181
  %v1186 = vshll.u32 %v1183, 16
  %v1187 = vshrl.u32 %v1183, 16
  %v1188 = vshll.u32 %v1184, 16
  %v1189 = vshrl.u32 %v1184, 16
  %vm1190 = vc.u32 %v1182, %v1186
  %v1191 = vsel %vm1190, 1, 0
  %v1192 = vadd.s32 %v1182, %v1186
  %v1193 = vadd.s32 %v1185, %v1191
  %vm1194 = vc.u32 %v1192, %v1188
  %v1195 = vsel %vm1194, 1, 0
  %v1196 = vadd.s32 %v1192, %v1188
  %v1197 = vadd.s32 %v1193, %v1195
  %v1198 = vadd.s32 %v1197, %v1187
  %v1199 = vadd.s32 %v1198, %v1189
  %v1200 = vand.u32 %v1177, 65535
  %v1201 = vshrl.u32 %v1177, 16
  %v1202 = vand.u32 %v1172, 65535
  %v1203 = vshrl.u32 %v1172, 16
  %v1204 = vmul.u32 %v1200, %v1202
  %v1205 = vmul.u32 %v1200, %v1203
  %v1206 = vmul.u32 %v1201, %v1202
  %v1207 = vmul.u32 %v1201, %v1203
  %v1208 = vshll.u32 %v1205, 16
  %v1209 = vshrl.u32 %v1205, 16
  %v1210 = vshll.u32 %v1206, 16
  %v1211 = vshrl.u32 %v1206, 16
  %vm1212 = vc.u32 %v1204, %v1208
  %v1213 = vsel %vm1212, 1, 0
  %v1214 = vadd.s32 %v1204, %v1208
  %v1215 = vadd.s32 %v1207, %v1213
  %vm1216 = vc.u32 %v1214, %v1210
  %v1217 = vsel %vm1216, 1, 0
  %v1218 = vadd.s32 %v1214, %v1210
  %v1219 = vadd.s32 %v1215, %v1217
  %v1220 = vadd.s32 %v1219, %v1209
  %v1221 = vadd.s32 %v1220, %v1211
  %v1222 = vmul.u32 %v1177, %v1168
  %v1223 = vadd.s32 %v1199, %v1218
  %vm1224 = vc.u32 %v1199, %v1218
  %v1225 = vadd.s32 %v1221, 1
  %v1226 = vsel %vm1224, %v1225, %v1221
  %v1227 = vadd.s32 %v1222, %v1226
  %v1228 = vadd.s32 %v1227, 536870912
  %v1229 = vshrl.u32 %v1228, 30
  %v1230 = vshll.u32 %v1229, 30
  %v1231 = vsub.s32 %v1227, %v1230
  %vm1232 = vcmp.lt.s32.totalorder %v1231, 0
  %v1233 = vsub.s32 0, %v1231
  %v1234 = vsel %vm1232, %v1233, %v1231
  %v1235 = vclz %v1234
  %v1236 = vsub.s32 %v1235, 2
  %vm1237 = vcmp.gt.s32.totalorder 0, %v1236
  %v1238 = vsel %vm1237, 0, %v1236
  %v1239 = vsub.s32 32, %v1238
  %v1240 = vshll.u32 %v1231, %v1238
  %v1241 = vshrl.u32 %v1223, %v1239
  %v1242 = vor.u32 %v1240, %v1241
  %v1243 = vsub.s32 4294967266, %v1238
  %v1244 = vadd.s32 %v1243, 127
  %v1245 = vshll.u32 %v1244, 23
  %v1246 = vor.u32 4788187, %v1245
  %v1247 = vand.u32 2147483647, %v1246
  %v1249 = vcvt.s32.f32 %v1242
  %v1250 = vmul.f32 %v1249, %v1247
  %v1251 = vxor.u32 %v1250, 2147483648
  %v1252 = vsel %vm1131, %v1251, %v1250
  %v1253 = vsub.s32 4, %v1229
  %v1254 = vsel %vm1131, %v1253, %v1229
  %v1255 = vsel %vm1130, %v509, %v1252
  %v1256 = vsel %vm1130, 0, %v1254
  %v1257 = vmul.f32 %v1255, %v1255
  %v1258 = vmul.f32 %v1257, -0.001358992
  %v1259 = vadd.f32 %v1258, 0.041655596
  %v1260 = vmul.f32 %v1257, %v1259
  %v1261 = vadd.f32 %v1260, -0.4999988
  %v1262 = vmul.f32 %v1257, %v1261
  %v1263 = vadd.f32 1.0, %v1262
  %v1264 = vmul.f32 %v1255, %v1255
  %v1265 = vmul.f32 %v1264, -0.00019511016
  %v1266 = vadd.f32 %v1265, 0.008332121
  %v1267 = vmul.f32 %v1264, %v1266
  %v1268 = vadd.f32 %v1267, -0.16666654
  %v1269 = vmul.f32 %v1264, %v1268
  %v1270 = vadd.f32 %v1269, 1.0
  %v1271 = vmul.f32 %v1270, %v1255
  %vm1272 = vweird.f32 %v509
  %v1273 = vand.u32 %v1256, 3
  %vm1274 = vcmp.lt.s32.totalorder %v1273, 2
  %vm1275 = vcmp.eq.s32.totalorder %v1273, 0
  %v1276 = vxor.u32 %v1271, 2147483648
  %v1277 = vsel %vm1275, %v1263, %v1276
  %vm1278 = vcmp.eq.s32.totalorder %v1273, 2
  %v1279 = vxor.u32 %v1263, 2147483648
  %v1280 = vsel %vm1278, %v1279, %v1271
  %v1281 = vsel %vm1274, %v1277, %v1280
  %v1282 = vsel %vm1272, nan, %v1281
  %v1283 = vand.u32 2147483647, %v510
  %vm1284 = vcmp.le.f32.partialorder %v1283, 0.7853982
  %vm1285 = vcmp.lt.s32.totalorder %v510, 0
  %v1286 = vand.u32 %v510, 2139095040
  %v1287 = vshrl.u32 %v1286, 23
  %v1288 = vsub.s32 %v1287, 127
  %v1289 = vand.u32 2147483647, %v510
  %v1290 = vand.u32 %v1289, 8388607
  %v1291 = vor.u32 %v1290, 8388608
  %v1292 = vsub.s32 0, %v1291
  %v1293 = vadd.s32 %v1288, 1
  %vm1294 = vcmp.gt.s32.totalorder %v1293, 0
  %v1295 = vsel %vm1294, %v1293, 0
  %v1296 = vshrl.u32 %v1295, 5
  %v1297 = vand.u32 %v1295, 31
  %v1298 = vsub.s32 32, %v1297
  %v1299 = vshrl.u32 683565275, %v1298
  %v1300 = vshll.u32 683565275, %v1297
  %v1301 = vshrl.u32 2475754826, %v1298
  %v1302 = vor.u32 %v1300, %v1301
  %v1303 = vshll.u32 2475754826, %v1297
  %v1304 = vshrl.u32 2131351028, %v1298
  %v1305 = vor.u32 %v1303, %v1304
  %v1306 = vshll.u32 2131351028, %v1297
  %v1307 = vshrl.u32 2102212464, %v1298
  %v1308 = vor.u32 %v1306, %v1307
  %v1309 = vshll.u32 2102212464, %v1297
  %v1310 = vshrl.u32 920167782, %v1298
  %v1311 = vor.u32 %v1309, %v1310
  %v1312 = vshll.u32 920167782, %v1297
  %v1313 = vshrl.u32 1326507024, %v1298
  %v1314 = vor.u32 %v1312, %v1313
  %vm1315 = vcmp.lt.s32.totalorder %v1296, 1
  %vm1316 = vcmp.lt.s32.totalorder %v1296, 2
  %vm1317 = vcmp.lt.s32.totalorder %v1296, 3
  %vm1318 = vcmp.lt.s32.totalorder %v1296, 4
  %v1319 = vsel %vm1315, %v1299, %v1302
  %v1320 = vsel %vm1318, %v1308, 2102212464
  %v1321 = vsel %vm1317, %v1305, %v1320
  %v1322 = vsel %vm1316, %v1319, %v1321
  %v1323 = vsel %vm1315, %v1302, %v1305
  %v1324 = vsel %vm1318, %v1311, 920167782
  %v1325 = vsel %vm1317, %v1308, %v1324
  %v1326 = vsel %vm1316, %v1323, %v1325
  %v1327 = vsel %vm1315, %v1305, %v1308
  %v1328 = vsel %vm1318, %v1314, 1326507024
  %v1329 = vsel %vm1317, %v1311, %v1328
  %v1330 = vsel %vm1316, %v1327, %v1329
  %v1331 = vshll.u32 %v1291, 8
  %v1332 = vand.u32 %v1331, 65535
  %v1333 = vshrl.u32 %v1331, 16
  %v1334 = vand.u32 %v1330, 65535
  %v1335 = vshrl.u32 %v1330, 16
  %v1336 = vmul.u32 %v1332, %v1334
  %v1337 = vmul.u32 %v1332, %v1335
  %v1338 = vmul.u32 %v1333, %v1334
  %v1339 = vmul.u32 %v1333, %v1335
  %v1340 = vshll.u32 %v1337, 16
  %v1341 = vshrl.u32 %v1337, 16
  %v1342 = vshll.u32 %v1338, 16
  %v1343 = vshrl.u32 %v1338, 16
  %vm1344 = vc.u32 %v1336, %v1340
  %v1345 = vsel %vm1344, 1, 0
  %v1346 = vadd.s32 %v1336, %v1340
  %v1347 = vadd.s32 %v1339, %v1345
  %vm1348 = vc.u32 %v1346, %v1342
  %v1349 = vsel %vm1348, 1, 0
  %v1350 = vadd.s32 %v1346, %v1342
  %v1351 = vadd.s32 %v1347, %v1349
  %v1352 = vadd.s32 %v1351, %v1341
  %v1353 = vadd.s32 %v1352, %v1343
  %v1354 = vand.u32 %v1331, 65535
  %v1355 = vshrl.u32 %v1331, 16
  %v1356 = vand.u32 %v1326, 65535
  %v1357 = vshrl.u32 %v1326, 16
  %v1358 = vmul.u32 %v1354, %v1356
  %v1359 = vmul.u32 %v1354, %v1357
  %v1360 = vmul.u32 %v1355, %v1356
  %v1361 = vmul.u32 %v1355, %v1357
  %v1362 = vshll.u32 %v1359, 16
  %v1363 = vshrl.u32 %v1359, 16
  %v1364 = vshll.u32 %v1360, 16
  %v1365 = vshrl.u32 %v1360, 16
  %vm1366 = vc.u32 %v1358, %v1362
  %v1367 = vsel %vm1366, 1, 0
  %v1368 = vadd.s32 %v1358, %v1362
  %v1369 = vadd.s32 %v1361, %v1367
  %vm1370 = vc.u32 %v1368, %v1364
  %v1371 = vsel %vm1370, 1, 0
  %v1372 = vadd.s32 %v1368, %v1364
  %v1373 = vadd.s32 %v1369, %v1371
  %v1374 = vadd.s32 %v1373, %v1363
  %v1375 = vadd.s32 %v1374, %v1365
  %v1376 = vmul.u32 %v1331, %v1322
  %v1377 = vadd.s32 %v1353, %v1372
  %vm1378 = vc.u32 %v1353, %v1372
  %v1379 = vadd.s32 %v1375, 1
  %v1380 = vsel %vm1378, %v1379, %v1375
  %v1381 = vadd.s32 %v1376, %v1380
  %v1382 = vadd.s32 %v1381, 536870912
  %v1383 = vshrl.u32 %v1382, 30
  %v1384 = vshll.u32 %v1383, 30
  %v1385 = vsub.s32 %v1381, %v1384
  %vm1386 = vcmp.lt.s32.totalorder %v1385, 0
  %v1387 = vsub.s32 0, %v1385
  %v1388 = vsel %vm1386, %v1387, %v1385
  %v1389 = vclz %v1388
  %v1390 = vsub.s32 %v1389, 2
  %vm1391 = vcmp.gt.s32.totalorder 0, %v1390
  %v1392 = vsel %vm1391, 0, %v1390
  %v1393 = vsub.s32 32, %v1392
  %v1394 = vshll.u32 %v1385, %v1392
  %v1395 = vshrl.u32 %v1377, %v1393
  %v1396 = vor.u32 %v1394, %v1395
  %v1397 = vsub.s32 4294967266, %v1392
  %v1398 = vadd.s32 %v1397, 127
  %v1399 = vshll.u32 %v1398, 23
  %v1400 = vor.u32 4788187, %v1399
  %v1401 = vand.u32 2147483647, %v1400
  %v1403 = vcvt.s32.f32 %v1396
  %v1404 = vmul.f32 %v1403, %v1401
  %v1405 = vxor.u32 %v1404, 2147483648
  %v1406 = vsel %vm1285, %v1405, %v1404
  %v1407 = vsub.s32 4, %v1383
  %v1408 = vsel %vm1285, %v1407, %v1383
  %v1409 = vsel %vm1284, %v510, %v1406
  %v1410 = vsel %vm1284, 0, %v1408
  %v1411 = vmul.f32 %v1409, %v1409
  %v1412 = vmul.f32 %v1411, -0.001358992
  %v1413 = vadd.f32 %v1412, 0.041655596
  %v1414 = vmul.f32 %v1411, %v1413
  %v1415 = vadd.f32 %v1414, -0.4999988
  %v1416 = vmul.f32 %v1411, %v1415
  %v1417 = vadd.f32 1.0, %v1416
  %v1418 = vmul.f32 %v1409, %v1409
  %v1419 = vmul.f32 %v1418, -0.00019511016
  %v1420 = vadd.f32 %v1419, 0.008332121
  %v1421 = vmul.f32 %v1418, %v1420
  %v1422 = vadd.f32 %v1421, -0.16666654
  %v1423 = vmul.f32 %v1418, %v1422
  %v1424 = vadd.f32 %v1423, 1.0
  %v1425 = vmul.f32 %v1424, %v1409
  %vm1426 = vweird.f32 %v510
  %v1427 = vand.u32 %v1410, 3
  %vm1428 = vcmp.lt.s32.totalorder %v1427, 2
  %vm1429 = vcmp.eq.s32.totalorder %v1427, 0
  %v1430 = vxor.u32 %v1425, 2147483648
  %v1431 = vsel %vm1429, %v1417, %v1430
  %vm1432 = vcmp.eq.s32.totalorder %v1427, 2
  %v1433 = vxor.u32 %v1417, 2147483648
  %v1434 = vsel %vm1432, %v1433, %v1425
  %v1435 = vsel %vm1428, %v1431, %v1434
  %v1436 = vsel %vm1426, nan, %v1435
  %v1437 = vand.u32 2147483647, %v511
  %vm1438 = vcmp.le.f32.partialorder %v1437, 0.7853982
  %vm1439 = vcmp.lt.s32.totalorder %v511, 0
  %v1440 = vand.u32 %v511, 2139095040
  %v1441 = vshrl.u32 %v1440, 23
  %v1442 = vsub.s32 %v1441, 127
  %v1443 = vand.u32 2147483647, %v511
  %v1444 = vand.u32 %v1443, 8388607
  %v1445 = vor.u32 %v1444, 8388608
  %v1446 = vsub.s32 0, %v1445
  %v1447 = vadd.s32 %v1442, 1
  %vm1448 = vcmp.gt.s32.totalorder %v1447, 0
  %v1449 = vsel %vm1448, %v1447, 0
  %v1450 = vshrl.u32 %v1449, 5
  %v1451 = vand.u32 %v1449, 31
  %v1452 = vsub.s32 32, %v1451
  %v1453 = vshrl.u32 683565275, %v1452
  %v1454 = vshll.u32 683565275, %v1451
  %v1455 = vshrl.u32 2475754826, %v1452
  %v1456 = vor.u32 %v1454, %v1455
  %v1457 = vshll.u32 2475754826, %v1451
  %v1458 = vshrl.u32 2131351028, %v1452
  %v1459 = vor.u32 %v1457, %v1458
  %v1460 = vshll.u32 2131351028, %v1451
  %v1461 = vshrl.u32 2102212464, %v1452
  %v1462 = vor.u32 %v1460, %v1461
  %v1463 = vshll.u32 2102212464, %v1451
  %v1464 = vshrl.u32 920167782, %v1452
  %v1465 = vor.u32 %v1463, %v1464
  %v1466 = vshll.u32 920167782, %v1451
  %v1467 = vshrl.u32 1326507024, %v1452
  %v1468 = vor.u32 %v1466, %v1467
  %vm1469 = vcmp.lt.s32.totalorder %v1450, 1
  %vm1470 = vcmp.lt.s32.totalorder %v1450, 2
  %vm1471 = vcmp.lt.s32.totalorder %v1450, 3
  %vm1472 = vcmp.lt.s32.totalorder %v1450, 4
  %v1473 = vsel %vm1469, %v1453, %v1456
  %v1474 = vsel %vm1472, %v1462, 2102212464
  %v1475 = vsel %vm1471, %v1459, %v1474
  %v1476 = vsel %vm1470, %v1473, %v1475
  %v1477 = vsel %vm1469, %v1456, %v1459
  %v1478 = vsel %vm1472, %v1465, 920167782
  %v1479 = vsel %vm1471, %v1462, %v1478
  %v1480 = vsel %vm1470, %v1477, %v1479
  %v1481 = vsel %vm1469, %v1459, %v1462
  %v1482 = vsel %vm1472, %v1468, 1326507024
  %v1483 = vsel %vm1471, %v1465, %v1482
  %v1484 = vsel %vm1470, %v1481, %v1483
  %v1485 = vshll.u32 %v1445, 8
  %v1486 = vand.u32 %v1485, 65535
  %v1487 = vshrl.u32 %v1485, 16
  %v1488 = vand.u32 %v1484, 65535
  %v1489 = vshrl.u32 %v1484, 16
  %v1490 = vmul.u32 %v1486, %v1488
  %v1491 = vmul.u32 %v1486, %v1489
  %v1492 = vmul.u32 %v1487, %v1488
  %v1493 = vmul.u32 %v1487, %v1489
  %v1494 = vshll.u32 %v1491, 16
  %v1495 = vshrl.u32 %v1491, 16
  %v1496 = vshll.u32 %v1492, 16
  %v1497 = vshrl.u32 %v1492, 16
  %vm1498 = vc.u32 %v1490, %v1494
  %v1499 = vsel %vm1498, 1, 0
  %v1500 = vadd.s32 %v1490, %v1494
  %v1501 = vadd.s32 %v1493, %v1499
  %vm1502 = vc.u32 %v1500, %v1496
  %v1503 = vsel %vm1502, 1, 0
  %v1504 = vadd.s32 %v1500, %v1496
  %v1505 = vadd.s32 %v1501, %v1503
  %v1506 = vadd.s32 %v1505, %v1495
  %v1507 = vadd.s32 %v1506, %v1497
  %v1508 = vand.u32 %v1485, 65535
  %v1509 = vshrl.u32 %v1485, 16
  %v1510 = vand.u32 %v1480, 65535
  %v1511 = vshrl.u32 %v1480, 16
  %v1512 = vmul.u32 %v1508, %v1510
  %v1513 = vmul.u32 %v1508, %v1511
  %v1514 = vmul.u32 %v1509, %v1510
  %v1515 = vmul.u32 %v1509, %v1511
  %v1516 = vshll.u32 %v1513, 16
  %v1517 = vshrl.u32 %v1513, 16
  %v1518 = vshll.u32 %v1514, 16
  %v1519 = vshrl.u32 %v1514, 16
  %vm1520 = vc.u32 %v1512, %v1516
  %v1521 = vsel %vm1520, 1, 0
  %v1522 = vadd.s32 %v1512, %v1516
  %v1523 = vadd.s32 %v1515, %v1521
  %vm1524 = vc.u32 %v1522, %v1518
  %v1525 = vsel %vm1524, 1, 0
  %v1526 = vadd.s32 %v1522, %v1518
  %v1527 = vadd.s32 %v1523, %v1525
  %v1528 = vadd.s32 %v1527, %v1517
  %v1529 = vadd.s32 %v1528, %v1519
  %v1530 = vmul.u32 %v1485, %v1476
  %v1531 = vadd.s32 %v1507, %v1526
  %vm1532 = vc.u32 %v1507, %v1526
  %v1533 = vadd.s32 %v1529, 1
  %v1534 = vsel %vm1532, %v1533, %v1529
  %v1535 = vadd.s32 %v1530, %v1534
  %v1536 = vadd.s32 %v1535, 536870912
  %v1537 = vshrl.u32 %v1536, 30
  %v1538 = vshll.u32 %v1537, 30
  %v1539 = vsub.s32 %v1535, %v1538
  %vm1540 = vcmp.lt.s32.totalorder %v1539, 0
  %v1541 = vsub.s32 0, %v1539
  %v1542 = vsel %vm1540, %v1541, %v1539
  %v1543 = vclz %v1542
  %v1544 = vsub.s32 %v1543, 2
  %vm1545 = vcmp.gt.s32.totalorder 0, %v1544
  %v1546 = vsel %vm1545, 0, %v1544
  %v1547 = vsub.s32 32, %v1546
  %v1548 = vshll.u32 %v1539, %v1546
  %v1549 = vshrl.u32 %v1531, %v1547
  %v1550 = vor.u32 %v1548, %v1549
  %v1551 = vsub.s32 4294967266, %v1546
  %v1552 = vadd.s32 %v1551, 127
  %v1553 = vshll.u32 %v1552, 23
  %v1554 = vor.u32 4788187, %v1553
  %v1555 = vand.u32 2147483647, %v1554
  %v1557 = vcvt.s32.f32 %v1550
  %v1558 = vmul.f32 %v1557, %v1555
  %v1559 = vxor.u32 %v1558, 2147483648
  %v1560 = vsel %vm1439, %v1559, %v1558
  %v1561 = vsub.s32 4, %v1537
  %v1562 = vsel %vm1439, %v1561, %v1537
  %v1563 = vsel %vm1438, %v511, %v1560
  %v1564 = vsel %vm1438, 0, %v1562
  %v1565 = vmul.f32 %v1563, %v1563
  %v1566 = vmul.f32 %v1565, -0.001358992
  %v1567 = vadd.f32 %v1566, 0.041655596
  %v1568 = vmul.f32 %v1565, %v1567
  %v1569 = vadd.f32 %v1568, -0.4999988
  %v1570 = vmul.f32 %v1565, %v1569
  %v1571 = vadd.f32 1.0, %v1570
  %v1572 = vmul.f32 %v1563, %v1563
  %v1573 = vmul.f32 %v1572, -0.00019511016
  %v1574 = vadd.f32 %v1573, 0.008332121
  %v1575 = vmul.f32 %v1572, %v1574
  %v1576 = vadd.f32 %v1575, -0.16666654
  %v1577 = vmul.f32 %v1572, %v1576
  %v1578 = vadd.f32 %v1577, 1.0
  %v1579 = vmul.f32 %v1578, %v1563
  %vm1580 = vweird.f32 %v511
  %v1581 = vand.u32 %v1564, 3
  %vm1582 = vcmp.lt.s32.totalorder %v1581, 2
  %vm1583 = vcmp.eq.s32.totalorder %v1581, 0
  %v1584 = vxor.u32 %v1579, 2147483648
  %v1585 = vsel %vm1583, %v1571, %v1584
  %vm1586 = vcmp.eq.s32.totalorder %v1581, 2
  %v1587 = vxor.u32 %v1571, 2147483648
  %v1588 = vsel %vm1586, %v1587, %v1579
  %v1589 = vsel %vm1582, %v1585, %v1588
  %v1590 = vsel %vm1580, nan, %v1589
  %v1591 = vand.u32 2147483647, %v512
  %vm1592 = vcmp.le.f32.partialorder %v1591, 0.7853982
  %vm1593 = vcmp.lt.s32.totalorder %v512, 0
  %v1594 = vand.u32 %v512, 2139095040
  %v1595 = vshrl.u32 %v1594, 23
  %v1596 = vsub.s32 %v1595, 127
  %v1597 = vand.u32 2147483647, %v512
  %v1598 = vand.u32 %v1597, 8388607
  %v1599 = vor.u32 %v1598, 8388608
  %v1600 = vsub.s32 0, %v1599
  %v1601 = vadd.s32 %v1596, 1
  %vm1602 = vcmp.gt.s32.totalorder %v1601, 0
  %v1603 = vsel %vm1602, %v1601, 0
  %v1604 = vshrl.u32 %v1603, 5
  %v1605 = vand.u32 %v1603, 31
  %v1606 = vsub.s32 32, %v1605
  %v1607 = vshrl.u32 683565275, %v1606
  %v1608 = vshll.u32 683565275, %v1605
  %v1609 = vshrl.u32 2475754826, %v1606
  %v1610 = vor.u32 %v1608, %v1609
  %v1611 = vshll.u32 2475754826, %v1605
  %v1612 = vshrl.u32 2131351028, %v1606
  %v1613 = vor.u32 %v1611, %v1612
  %v1614 = vshll.u32 2131351028, %v1605
  %v1615 = vshrl.u32 2102212464, %v1606
  %v1616 = vor.u32 %v1614, %v1615
  %v1617 = vshll.u32 2102212464, %v1605
  %v1618 = vshrl.u32 920167782, %v1606
  %v1619 = vor.u32 %v1617, %v1618
  %v1620 = vshll.u32 920167782, %v1605
  %v1621 = vshrl.u32 1326507024, %v1606
  %v1622 = vor.u32 %v1620, %v1621
  %vm1623 = vcmp.lt.s32.totalorder %v1604, 1
  %vm1624 = vcmp.lt.s32.totalorder %v1604, 2
  %vm1625 = vcmp.lt.s32.totalorder %v1604, 3
  %vm1626 = vcmp.lt.s32.totalorder %v1604, 4
  %v1627 = vsel %vm1623, %v1607, %v1610
  %v1628 = vsel %vm1626, %v1616, 2102212464
  %v1629 = vsel %vm1625, %v1613, %v1628
  %v1630 = vsel %vm1624, %v1627, %v1629
  %v1631 = vsel %vm1623, %v1610, %v1613
  %v1632 = vsel %vm1626, %v1619, 920167782
  %v1633 = vsel %vm1625, %v1616, %v1632
  %v1634 = vsel %vm1624, %v1631, %v1633
  %v1635 = vsel %vm1623, %v1613, %v1616
  %v1636 = vsel %vm1626, %v1622, 1326507024
  %v1637 = vsel %vm1625, %v1619, %v1636
  %v1638 = vsel %vm1624, %v1635, %v1637
  %v1639 = vshll.u32 %v1599, 8
  %v1640 = vand.u32 %v1639, 65535
  %v1641 = vshrl.u32 %v1639, 16
  %v1642 = vand.u32 %v1638, 65535
  %v1643 = vshrl.u32 %v1638, 16
  %v1644 = vmul.u32 %v1640, %v1642
  %v1645 = vmul.u32 %v1640, %v1643
  %v1646 = vmul.u32 %v1641, %v1642
  %v1647 = vmul.u32 %v1641, %v1643
  %v1648 = vshll.u32 %v1645, 16
  %v1649 = vshrl.u32 %v1645, 16
  %v1650 = vshll.u32 %v1646, 16
  %v1651 = vshrl.u32 %v1646, 16
  %vm1652 = vc.u32 %v1644, %v1648
  %v1653 = vsel %vm1652, 1, 0
  %v1654 = vadd.s32 %v1644, %v1648
  %v1655 = vadd.s32 %v1647, %v1653
  %vm1656 = vc.u32 %v1654, %v1650
  %v1657 = vsel %vm1656, 1, 0
  %v1658 = vadd.s32 %v1654, %v1650
  %v1659 = vadd.s32 %v1655, %v1657
  %v1660 = vadd.s32 %v1659, %v1649
  %v1661 = vadd.s32 %v1660, %v1651
  %v1662 = vand.u32 %v1639, 65535
  %v1663 = vshrl.u32 %v1639, 16
  %v1664 = vand.u32 %v1634, 65535
  %v1665 = vshrl.u32 %v1634, 16
  %v1666 = vmul.u32 %v1662, %v1664
  %v1667 = vmul.u32 %v1662, %v1665
  %v1668 = vmul.u32 %v1663, %v1664
  %v1669 = vmul.u32 %v1663, %v1665
  %v1670 = vshll.u32 %v1667, 16
  %v1671 = vshrl.u32 %v1667, 16
  %v1672 = vshll.u32 %v1668, 16
  %v1673 = vshrl.u32 %v1668, 16
  %vm1674 = vc.u32 %v1666, %v1670
  %v1675 = vsel %vm1674, 1, 0
  %v1676 = vadd.s32 %v1666, %v1670
  %v1677 = vadd.s32 %v1669, %v1675
  %vm1678 = vc.u32 %v1676, %v1672
  %v1679 = vsel %vm1678, 1, 0
  %v1680 = vadd.s32 %v1676, %v1672
  %v1681 = vadd.s32 %v1677, %v1679
  %v1682 = vadd.s32 %v1681, %v1671
  %v1683 = vadd.s32 %v1682, %v1673
  %v1684 = vmul.u32 %v1639, %v1630
  %v1685 = vadd.s32 %v1661, %v1680
  %vm1686 = vc.u32 %v1661, %v1680
  %v1687 = vadd.s32 %v1683, 1
  %v1688 = vsel %vm1686, %v1687, %v1683
  %v1689 = vadd.s32 %v1684, %v1688
  %v1690 = vadd.s32 %v1689, 536870912
  %v1691 = vshrl.u32 %v1690, 30
  %v1692 = vshll.u32 %v1691, 30
  %v1693 = vsub.s32 %v1689, %v1692
  %vm1694 = vcmp.lt.s32.totalorder %v1693, 0
  %v1695 = vsub.s32 0, %v1693
  %v1696 = vsel %vm1694, %v1695, %v1693
  %v1697 = vclz %v1696
  %v1698 = vsub.s32 %v1697, 2
  %vm1699 = vcmp.gt.s32.totalorder 0, %v1698
  %v1700 = vsel %vm1699, 0, %v1698
  %v1701 = vsub.s32 32, %v1700
  %v1702 = vshll.u32 %v1693, %v1700
  %v1703 = vshrl.u32 %v1685, %v1701
  %v1704 = vor.u32 %v1702, %v1703
  %v1705 = vsub.s32 4294967266, %v1700
  %v1706 = vadd.s32 %v1705, 127
  %v1707 = vshll.u32 %v1706, 23
  %v1708 = vor.u32 4788187, %v1707
  %v1709 = vand.u32 2147483647, %v1708
  %v1711 = vcvt.s32.f32 %v1704
  %v1712 = vmul.f32 %v1711, %v1709
  %v1713 = vxor.u32 %v1712, 2147483648
  %v1714 = vsel %vm1593, %v1713, %v1712
  %v1715 = vsub.s32 4, %v1691
  %v1716 = vsel %vm1593, %v1715, %v1691
  %v1717 = vsel %vm1592, %v512, %v1714
  %v1718 = vsel %vm1592, 0, %v1716
  %v1719 = vmul.f32 %v1717, %v1717
  %v1720 = vmul.f32 %v1719, -0.001358992
  %v1721 = vadd.f32 %v1720, 0.041655596
  %v1722 = vmul.f32 %v1719, %v1721
  %v1723 = vadd.f32 %v1722, -0.4999988
  %v1724 = vmul.f32 %v1719, %v1723
  %v1725 = vadd.f32 1.0, %v1724
  %v1726 = vmul.f32 %v1717, %v1717
  %v1727 = vmul.f32 %v1726, -0.00019511016
  %v1728 = vadd.f32 %v1727, 0.008332121
  %v1729 = vmul.f32 %v1726, %v1728
  %v1730 = vadd.f32 %v1729, -0.16666654
  %v1731 = vmul.f32 %v1726, %v1730
  %v1732 = vadd.f32 %v1731, 1.0
  %v1733 = vmul.f32 %v1732, %v1717
  %vm1734 = vweird.f32 %v512
  %v1735 = vand.u32 %v1718, 3
  %vm1736 = vcmp.lt.s32.totalorder %v1735, 2
  %vm1737 = vcmp.eq.s32.totalorder %v1735, 0
  %v1738 = vxor.u32 %v1733, 2147483648
  %v1739 = vsel %vm1737, %v1725, %v1738
  %vm1740 = vcmp.eq.s32.totalorder %v1735, 2
  %v1741 = vxor.u32 %v1725, 2147483648
  %v1742 = vsel %vm1740, %v1741, %v1733
  %v1743 = vsel %vm1736, %v1739, %v1742
  %v1744 = vsel %vm1734, nan, %v1743
  %v1745 = vmul.f32 %v420, %v666
  %v1746 = vmul.f32 %v432, %v820
  %v1747 = vmul.f32 %v444, %v974
  %v1748 = vmul.f32 %v456, %v1128
  %v1749 = vmul.f32 %v468, %v1282
  %v1750 = vmul.f32 %v480, %v1436
  %v1751 = vmul.f32 %v492, %v1590
  %v1752 = vmul.f32 %v504, %v1744
  %1753 = vst [vmem:[%s1] sm:$0xff] %v1745
  %1754 = vst [vmem:[%s1 + $0x8] sm:$0xff] %v1746
  %1755 = vst [vmem:[%s1 + $0x10] sm:$0xff] %v1747
  %1756 = vst [vmem:[%s1 + $0x18] sm:$0xff] %v1748
  %1757 = vst [vmem:[%s1 + $0x40] sm:$0xff] %v1749
  %1758 = vst [vmem:[%s1 + $0x48] sm:$0xff] %v1750
  %1759 = vst [vmem:[%s1 + $0x50] sm:$0xff] %v1751
  %1760 = vst [vmem:[%s1 + $0x58] sm:$0xff] %v1752
  %v1761 = vand.u32 2147483647, %v505
  %vm1762 = vcmp.le.f32.partialorder %v1761, 0.7853982
  %vm1763 = vcmp.lt.s32.totalorder %v505, 0
  %v1764 = vand.u32 %v505, 2139095040
  %v1765 = vshrl.u32 %v1764, 23
  %v1766 = vsub.s32 %v1765, 127
  %v1767 = vand.u32 2147483647, %v505
  %v1768 = vand.u32 %v1767, 8388607
  %v1769 = vor.u32 %v1768, 8388608
  %v1770 = vsub.s32 0, %v1769
  %v1771 = vadd.s32 %v1766, 1
  %vm1772 = vcmp.gt.s32.totalorder %v1771, 0
  %v1773 = vsel %vm1772, %v1771, 0
  %v1774 = vshrl.u32 %v1773, 5
  %v1775 = vand.u32 %v1773, 31
  %v1776 = vsub.s32 32, %v1775
  %v1777 = vshrl.u32 683565275, %v1776
  %v1778 = vshll.u32 683565275, %v1775
  %v1779 = vshrl.u32 2475754826, %v1776
  %v1780 = vor.u32 %v1778, %v1779
  %v1781 = vshll.u32 2475754826, %v1775
  %v1782 = vshrl.u32 2131351028, %v1776
  %v1783 = vor.u32 %v1781, %v1782
  %v1784 = vshll.u32 2131351028, %v1775
  %v1785 = vshrl.u32 2102212464, %v1776
  %v1786 = vor.u32 %v1784, %v1785
  %v1787 = vshll.u32 2102212464, %v1775
  %v1788 = vshrl.u32 920167782, %v1776
  %v1789 = vor.u32 %v1787, %v1788
  %v1790 = vshll.u32 920167782, %v1775
  %v1791 = vshrl.u32 1326507024, %v1776
  %v1792 = vor.u32 %v1790, %v1791
  %vm1793 = vcmp.lt.s32.totalorder %v1774, 1
  %vm1794 = vcmp.lt.s32.totalorder %v1774, 2
  %vm1795 = vcmp.lt.s32.totalorder %v1774, 3
  %vm1796 = vcmp.lt.s32.totalorder %v1774, 4
  %v1797 = vsel %vm1793, %v1777, %v1780
  %v1798 = vsel %vm1796, %v1786, 2102212464
  %v1799 = vsel %vm1795, %v1783, %v1798
  %v1800 = vsel %vm1794, %v1797, %v1799
  %v1801 = vsel %vm1793, %v1780, %v1783
  %v1802 = vsel %vm1796, %v1789, 920167782
  %v1803 = vsel %vm1795, %v1786, %v1802
  %v1804 = vsel %vm1794, %v1801, %v1803
  %v1805 = vsel %vm1793, %v1783, %v1786
  %v1806 = vsel %vm1796, %v1792, 1326507024
  %v1807 = vsel %vm1795, %v1789, %v1806
  %v1808 = vsel %vm1794, %v1805, %v1807
  %v1809 = vshll.u32 %v1769, 8
  %v1810 = vand.u32 %v1809, 65535
  %v1811 = vshrl.u32 %v1809, 16
  %v1812 = vand.u32 %v1808, 65535
  %v1813 = vshrl.u32 %v1808, 16
  %v1814 = vmul.u32 %v1810, %v1812
  %v1815 = vmul.u32 %v1810, %v1813
  %v1816 = vmul.u32 %v1811, %v1812
  %v1817 = vmul.u32 %v1811, %v1813
  %v1818 = vshll.u32 %v1815, 16
  %v1819 = vshrl.u32 %v1815, 16
  %v1820 = vshll.u32 %v1816, 16
  %v1821 = vshrl.u32 %v1816, 16
  %vm1822 = vc.u32 %v1814, %v1818
  %v1823 = vsel %vm1822, 1, 0
  %v1824 = vadd.s32 %v1814, %v1818
  %v1825 = vadd.s32 %v1817, %v1823
  %vm1826 = vc.u32 %v1824, %v1820
  %v1827 = vsel %vm1826, 1, 0
  %v1828 = vadd.s32 %v1824, %v1820
  %v1829 = vadd.s32 %v1825, %v1827
  %v1830 = vadd.s32 %v1829, %v1819
  %v1831 = vadd.s32 %v1830, %v1821
  %v1832 = vand.u32 %v1809, 65535
  %v1833 = vshrl.u32 %v1809, 16
  %v1834 = vand.u32 %v1804, 65535
  %v1835 = vshrl.u32 %v1804, 16
  %v1836 = vmul.u32 %v1832, %v1834
  %v1837 = vmul.u32 %v1832, %v1835
  %v1838 = vmul.u32 %v1833, %v1834
  %v1839 = vmul.u32 %v1833, %v1835
  %v1840 = vshll.u32 %v1837, 16
  %v1841 = vshrl.u32 %v1837, 16
  %v1842 = vshll.u32 %v1838, 16
  %v1843 = vshrl.u32 %v1838, 16
  %vm1844 = vc.u32 %v1836, %v1840
  %v1845 = vsel %vm1844, 1, 0
  %v1846 = vadd.s32 %v1836, %v1840
  %v1847 = vadd.s32 %v1839, %v1845
  %vm1848 = vc.u32 %v1846, %v1842
  %v1849 = vsel %vm1848, 1, 0
  %v1850 = vadd.s32 %v1846, %v1842
  %v1851 = vadd.s32 %v1847, %v1849
  %v1852 = vadd.s32 %v1851, %v1841
  %v1853 = vadd.s32 %v1852, %v1843
  %v1854 = vmul.u32 %v1809, %v1800
  %v1855 = vadd.s32 %v1831, %v1850
  %vm1856 = vc.u32 %v1831, %v1850
  %v1857 = vadd.s32 %v1853, 1
  %v1858 = vsel %vm1856, %v1857, %v1853
  %v1859 = vadd.s32 %v1854, %v1858
  %v1860 = vadd.s32 %v1859, 536870912
  %v1861 = vshrl.u32 %v1860, 30
  %v1862 = vshll.u32 %v1861, 30
  %v1863 = vsub.s32 %v1859, %v1862
  %vm1864 = vcmp.lt.s32.totalorder %v1863, 0
  %v1865 = vsub.s32 0, %v1863
  %v1866 = vsel %vm1864, %v1865, %v1863
  %v1867 = vclz %v1866
  %v1868 = vsub.s32 %v1867, 2
  %vm1869 = vcmp.gt.s32.totalorder 0, %v1868
  %v1870 = vsel %vm1869, 0, %v1868
  %v1871 = vsub.s32 32, %v1870
  %v1872 = vshll.u32 %v1863, %v1870
  %v1873 = vshrl.u32 %v1855, %v1871
  %v1874 = vor.u32 %v1872, %v1873
  %v1875 = vsub.s32 4294967266, %v1870
  %v1876 = vadd.s32 %v1875, 127
  %v1877 = vshll.u32 %v1876, 23
  %v1878 = vor.u32 4788187, %v1877
  %v1879 = vand.u32 2147483647, %v1878
  %v1881 = vcvt.s32.f32 %v1874
  %v1882 = vmul.f32 %v1881, %v1879
  %v1883 = vxor.u32 %v1882, 2147483648
  %v1884 = vsel %vm1763, %v1883, %v1882
  %v1885 = vsub.s32 4, %v1861
  %v1886 = vsel %vm1763, %v1885, %v1861
  %v1887 = vsel %vm1762, %v505, %v1884
  %v1888 = vsel %vm1762, 0, %v1886
  %v1889 = vmul.f32 %v1887, %v1887
  %v1890 = vmul.f32 %v1889, -0.001358992
  %v1891 = vadd.f32 %v1890, 0.041655596
  %v1892 = vmul.f32 %v1889, %v1891
  %v1893 = vadd.f32 %v1892, -0.4999988
  %v1894 = vmul.f32 %v1889, %v1893
  %v1895 = vadd.f32 1.0, %v1894
  %v1896 = vmul.f32 %v1887, %v1887
  %v1897 = vmul.f32 %v1896, -0.00019511016
  %v1898 = vadd.f32 %v1897, 0.008332121
  %v1899 = vmul.f32 %v1896, %v1898
  %v1900 = vadd.f32 %v1899, -0.16666654
  %v1901 = vmul.f32 %v1896, %v1900
  %v1902 = vadd.f32 %v1901, 1.0
  %v1903 = vmul.f32 %v1902, %v1887
  %vm1904 = vweird.f32 %v505
  %v1905 = vadd.s32 %v1888, 3
  %v1906 = vand.u32 %v1905, 3
  %vm1907 = vcmp.lt.s32.totalorder %v1906, 2
  %vm1908 = vcmp.eq.s32.totalorder %v1906, 0
  %v1909 = vxor.u32 %v1903, 2147483648
  %v1910 = vsel %vm1908, %v1895, %v1909
  %vm1911 = vcmp.eq.s32.totalorder %v1906, 2
  %v1912 = vxor.u32 %v1895, 2147483648
  %v1913 = vsel %vm1911, %v1912, %v1903
  %v1914 = vsel %vm1907, %v1910, %v1913
  %v1915 = vsel %vm1904, nan, %v1914
  %v1916 = vand.u32 2147483647, %v506
  %vm1917 = vcmp.le.f32.partialorder %v1916, 0.7853982
  %vm1918 = vcmp.lt.s32.totalorder %v506, 0
  %v1919 = vand.u32 %v506, 2139095040
  %v1920 = vshrl.u32 %v1919, 23
  %v1921 = vsub.s32 %v1920, 127
  %v1922 = vand.u32 2147483647, %v506
  %v1923 = vand.u32 %v1922, 8388607
  %v1924 = vor.u32 %v1923, 8388608
  %v1925 = vsub.s32 0, %v1924
  %v1926 = vadd.s32 %v1921, 1
  %vm1927 = vcmp.gt.s32.totalorder %v1926, 0
  %v1928 = vsel %vm1927, %v1926, 0
  %v1929 = vshrl.u32 %v1928, 5
  %v1930 = vand.u32 %v1928, 31
  %v1931 = vsub.s32 32, %v1930
  %v1932 = vshrl.u32 683565275, %v1931
  %v1933 = vshll.u32 683565275, %v1930
  %v1934 = vshrl.u32 2475754826, %v1931
  %v1935 = vor.u32 %v1933, %v1934
  %v1936 = vshll.u32 2475754826, %v1930
  %v1937 = vshrl.u32 2131351028, %v1931
  %v1938 = vor.u32 %v1936, %v1937
  %v1939 = vshll.u32 2131351028, %v1930
  %v1940 = vshrl.u32 2102212464, %v1931
  %v1941 = vor.u32 %v1939, %v1940
  %v1942 = vshll.u32 2102212464, %v1930
  %v1943 = vshrl.u32 920167782, %v1931
  %v1944 = vor.u32 %v1942, %v1943
  %v1945 = vshll.u32 920167782, %v1930
  %v1946 = vshrl.u32 1326507024, %v1931
  %v1947 = vor.u32 %v1945, %v1946
  %vm1948 = vcmp.lt.s32.totalorder %v1929, 1
  %vm1949 = vcmp.lt.s32.totalorder %v1929, 2
  %vm1950 = vcmp.lt.s32.totalorder %v1929, 3
  %vm1951 = vcmp.lt.s32.totalorder %v1929, 4
  %v1952 = vsel %vm1948, %v1932, %v1935
  %v1953 = vsel %vm1951, %v1941, 2102212464
  %v1954 = vsel %vm1950, %v1938, %v1953
  %v1955 = vsel %vm1949, %v1952, %v1954
  %v1956 = vsel %vm1948, %v1935, %v1938
  %v1957 = vsel %vm1951, %v1944, 920167782
  %v1958 = vsel %vm1950, %v1941, %v1957
  %v1959 = vsel %vm1949, %v1956, %v1958
  %v1960 = vsel %vm1948, %v1938, %v1941
  %v1961 = vsel %vm1951, %v1947, 1326507024
  %v1962 = vsel %vm1950, %v1944, %v1961
  %v1963 = vsel %vm1949, %v1960, %v1962
  %v1964 = vshll.u32 %v1924, 8
  %v1965 = vand.u32 %v1964, 65535
  %v1966 = vshrl.u32 %v1964, 16
  %v1967 = vand.u32 %v1963, 65535
  %v1968 = vshrl.u32 %v1963, 16
  %v1969 = vmul.u32 %v1965, %v1967
  %v1970 = vmul.u32 %v1965, %v1968
  %v1971 = vmul.u32 %v1966, %v1967
  %v1972 = vmul.u32 %v1966, %v1968
  %v1973 = vshll.u32 %v1970, 16
  %v1974 = vshrl.u32 %v1970, 16
  %v1975 = vshll.u32 %v1971, 16
  %v1976 = vshrl.u32 %v1971, 16
  %vm1977 = vc.u32 %v1969, %v1973
  %v1978 = vsel %vm1977, 1, 0
  %v1979 = vadd.s32 %v1969, %v1973
  %v1980 = vadd.s32 %v1972, %v1978
  %vm1981 = vc.u32 %v1979, %v1975
  %v1982 = vsel %vm1981, 1, 0
  %v1983 = vadd.s32 %v1979, %v1975
  %v1984 = vadd.s32 %v1980, %v1982
  %v1985 = vadd.s32 %v1984, %v1974
  %v1986 = vadd.s32 %v1985, %v1976
  %v1987 = vand.u32 %v1964, 65535
  %v1988 = vshrl.u32 %v1964, 16
  %v1989 = vand.u32 %v1959, 65535
  %v1990 = vshrl.u32 %v1959, 16
  %v1991 = vmul.u32 %v1987, %v1989
  %v1992 = vmul.u32 %v1987, %v1990
  %v1993 = vmul.u32 %v1988, %v1989
  %v1994 = vmul.u32 %v1988, %v1990
  %v1995 = vshll.u32 %v1992, 16
  %v1996 = vshrl.u32 %v1992, 16
  %v1997 = vshll.u32 %v1993, 16
  %v1998 = vshrl.u32 %v1993, 16
  %vm1999 = vc.u32 %v1991, %v1995
  %v2000 = vsel %vm1999, 1, 0
  %v2001 = vadd.s32 %v1991, %v1995
  %v2002 = vadd.s32 %v1994, %v2000
  %vm2003 = vc.u32 %v2001, %v1997
  %v2004 = vsel %vm2003, 1, 0
  %v2005 = vadd.s32 %v2001, %v1997
  %v2006 = vadd.s32 %v2002, %v2004
  %v2007 = vadd.s32 %v2006, %v1996
  %v2008 = vadd.s32 %v2007, %v1998
  %v2009 = vmul.u32 %v1964, %v1955
  %v2010 = vadd.s32 %v1986, %v2005
  %vm2011 = vc.u32 %v1986, %v2005
  %v2012 = vadd.s32 %v2008, 1
  %v2013 = vsel %vm2011, %v2012, %v2008
  %v2014 = vadd.s32 %v2009, %v2013
  %v2015 = vadd.s32 %v2014, 536870912
  %v2016 = vshrl.u32 %v2015, 30
  %v2017 = vshll.u32 %v2016, 30
  %v2018 = vsub.s32 %v2014, %v2017
  %vm2019 = vcmp.lt.s32.totalorder %v2018, 0
  %v2020 = vsub.s32 0, %v2018
  %v2021 = vsel %vm2019, %v2020, %v2018
  %v2022 = vclz %v2021
  %v2023 = vsub.s32 %v2022, 2
  %vm2024 = vcmp.gt.s32.totalorder 0, %v2023
  %v2025 = vsel %vm2024, 0, %v2023
  %v2026 = vsub.s32 32, %v2025
  %v2027 = vshll.u32 %v2018, %v2025
  %v2028 = vshrl.u32 %v2010, %v2026
  %v2029 = vor.u32 %v2027, %v2028
  %v2030 = vsub.s32 4294967266, %v2025
  %v2031 = vadd.s32 %v2030, 127
  %v2032 = vshll.u32 %v2031, 23
  %v2033 = vor.u32 4788187, %v2032
  %v2034 = vand.u32 2147483647, %v2033
  %v2036 = vcvt.s32.f32 %v2029
  %v2037 = vmul.f32 %v2036, %v2034
  %v2038 = vxor.u32 %v2037, 2147483648
  %v2039 = vsel %vm1918, %v2038, %v2037
  %v2040 = vsub.s32 4, %v2016
  %v2041 = vsel %vm1918, %v2040, %v2016
  %v2042 = vsel %vm1917, %v506, %v2039
  %v2043 = vsel %vm1917, 0, %v2041
  %v2044 = vmul.f32 %v2042, %v2042
  %v2045 = vmul.f32 %v2044, -0.001358992
  %v2046 = vadd.f32 %v2045, 0.041655596
  %v2047 = vmul.f32 %v2044, %v2046
  %v2048 = vadd.f32 %v2047, -0.4999988
  %v2049 = vmul.f32 %v2044, %v2048
  %v2050 = vadd.f32 1.0, %v2049
  %v2051 = vmul.f32 %v2042, %v2042
  %v2052 = vmul.f32 %v2051, -0.00019511016
  %v2053 = vadd.f32 %v2052, 0.008332121
  %v2054 = vmul.f32 %v2051, %v2053
  %v2055 = vadd.f32 %v2054, -0.16666654
  %v2056 = vmul.f32 %v2051, %v2055
  %v2057 = vadd.f32 %v2056, 1.0
  %v2058 = vmul.f32 %v2057, %v2042
  %vm2059 = vweird.f32 %v506
  %v2060 = vadd.s32 %v2043, 3
  %v2061 = vand.u32 %v2060, 3
  %vm2062 = vcmp.lt.s32.totalorder %v2061, 2
  %vm2063 = vcmp.eq.s32.totalorder %v2061, 0
  %v2064 = vxor.u32 %v2058, 2147483648
  %v2065 = vsel %vm2063, %v2050, %v2064
  %vm2066 = vcmp.eq.s32.totalorder %v2061, 2
  %v2067 = vxor.u32 %v2050, 2147483648
  %v2068 = vsel %vm2066, %v2067, %v2058
  %v2069 = vsel %vm2062, %v2065, %v2068
  %v2070 = vsel %vm2059, nan, %v2069
  %v2071 = vand.u32 2147483647, %v507
  %vm2072 = vcmp.le.f32.partialorder %v2071, 0.7853982
  %vm2073 = vcmp.lt.s32.totalorder %v507, 0
  %v2074 = vand.u32 %v507, 2139095040
  %v2075 = vshrl.u32 %v2074, 23
  %v2076 = vsub.s32 %v2075, 127
  %v2077 = vand.u32 2147483647, %v507
  %v2078 = vand.u32 %v2077, 8388607
  %v2079 = vor.u32 %v2078, 8388608
  %v2080 = vsub.s32 0, %v2079
  %v2081 = vadd.s32 %v2076, 1
  %vm2082 = vcmp.gt.s32.totalorder %v2081, 0
  %v2083 = vsel %vm2082, %v2081, 0
  %v2084 = vshrl.u32 %v2083, 5
  %v2085 = vand.u32 %v2083, 31
  %v2086 = vsub.s32 32, %v2085
  %v2087 = vshrl.u32 683565275, %v2086
  %v2088 = vshll.u32 683565275, %v2085
  %v2089 = vshrl.u32 2475754826, %v2086
  %v2090 = vor.u32 %v2088, %v2089
  %v2091 = vshll.u32 2475754826, %v2085
  %v2092 = vshrl.u32 2131351028, %v2086
  %v2093 = vor.u32 %v2091, %v2092
  %v2094 = vshll.u32 2131351028, %v2085
  %v2095 = vshrl.u32 2102212464, %v2086
  %v2096 = vor.u32 %v2094, %v2095
  %v2097 = vshll.u32 2102212464, %v2085
  %v2098 = vshrl.u32 920167782, %v2086
  %v2099 = vor.u32 %v2097, %v2098
  %v2100 = vshll.u32 920167782, %v2085
  %v2101 = vshrl.u32 1326507024, %v2086
  %v2102 = vor.u32 %v2100, %v2101
  %vm2103 = vcmp.lt.s32.totalorder %v2084, 1
  %vm2104 = vcmp.lt.s32.totalorder %v2084, 2
  %vm2105 = vcmp.lt.s32.totalorder %v2084, 3
  %vm2106 = vcmp.lt.s32.totalorder %v2084, 4
  %v2107 = vsel %vm2103, %v2087, %v2090
  %v2108 = vsel %vm2106, %v2096, 2102212464
  %v2109 = vsel %vm2105, %v2093, %v2108
  %v2110 = vsel %vm2104, %v2107, %v2109
  %v2111 = vsel %vm2103, %v2090, %v2093
  %v2112 = vsel %vm2106, %v2099, 920167782
  %v2113 = vsel %vm2105, %v2096, %v2112
  %v2114 = vsel %vm2104, %v2111, %v2113
  %v2115 = vsel %vm2103, %v2093, %v2096
  %v2116 = vsel %vm2106, %v2102, 1326507024
  %v2117 = vsel %vm2105, %v2099, %v2116
  %v2118 = vsel %vm2104, %v2115, %v2117
  %v2119 = vshll.u32 %v2079, 8
  %v2120 = vand.u32 %v2119, 65535
  %v2121 = vshrl.u32 %v2119, 16
  %v2122 = vand.u32 %v2118, 65535
  %v2123 = vshrl.u32 %v2118, 16
  %v2124 = vmul.u32 %v2120, %v2122
  %v2125 = vmul.u32 %v2120, %v2123
  %v2126 = vmul.u32 %v2121, %v2122
  %v2127 = vmul.u32 %v2121, %v2123
  %v2128 = vshll.u32 %v2125, 16
  %v2129 = vshrl.u32 %v2125, 16
  %v2130 = vshll.u32 %v2126, 16
  %v2131 = vshrl.u32 %v2126, 16
  %vm2132 = vc.u32 %v2124, %v2128
  %v2133 = vsel %vm2132, 1, 0
  %v2134 = vadd.s32 %v2124, %v2128
  %v2135 = vadd.s32 %v2127, %v2133
  %vm2136 = vc.u32 %v2134, %v2130
  %v2137 = vsel %vm2136, 1, 0
  %v2138 = vadd.s32 %v2134, %v2130
  %v2139 = vadd.s32 %v2135, %v2137
  %v2140 = vadd.s32 %v2139, %v2129
  %v2141 = vadd.s32 %v2140, %v2131
  %v2142 = vand.u32 %v2119, 65535
  %v2143 = vshrl.u32 %v2119, 16
  %v2144 = vand.u32 %v2114, 65535
  %v2145 = vshrl.u32 %v2114, 16
  %v2146 = vmul.u32 %v2142, %v2144
  %v2147 = vmul.u32 %v2142, %v2145
  %v2148 = vmul.u32 %v2143, %v2144
  %v2149 = vmul.u32 %v2143, %v2145
  %v2150 = vshll.u32 %v2147, 16
  %v2151 = vshrl.u32 %v2147, 16
  %v2152 = vshll.u32 %v2148, 16
  %v2153 = vshrl.u32 %v2148, 16
  %vm2154 = vc.u32 %v2146, %v2150
  %v2155 = vsel %vm2154, 1, 0
  %v2156 = vadd.s32 %v2146, %v2150
  %v2157 = vadd.s32 %v2149, %v2155
  %vm2158 = vc.u32 %v2156, %v2152
  %v2159 = vsel %vm2158, 1, 0
  %v2160 = vadd.s32 %v2156, %v2152
  %v2161 = vadd.s32 %v2157, %v2159
  %v2162 = vadd.s32 %v2161, %v2151
  %v2163 = vadd.s32 %v2162, %v2153
  %v2164 = vmul.u32 %v2119, %v2110
  %v2165 = vadd.s32 %v2141, %v2160
  %vm2166 = vc.u32 %v2141, %v2160
  %v2167 = vadd.s32 %v2163, 1
  %v2168 = vsel %vm2166, %v2167, %v2163
  %v2169 = vadd.s32 %v2164, %v2168
  %v2170 = vadd.s32 %v2169, 536870912
  %v2171 = vshrl.u32 %v2170, 30
  %v2172 = vshll.u32 %v2171, 30
  %v2173 = vsub.s32 %v2169, %v2172
  %vm2174 = vcmp.lt.s32.totalorder %v2173, 0
  %v2175 = vsub.s32 0, %v2173
  %v2176 = vsel %vm2174, %v2175, %v2173
  %v2177 = vclz %v2176
  %v2178 = vsub.s32 %v2177, 2
  %vm2179 = vcmp.gt.s32.totalorder 0, %v2178
  %v2180 = vsel %vm2179, 0, %v2178
  %v2181 = vsub.s32 32, %v2180
  %v2182 = vshll.u32 %v2173, %v2180
  %v2183 = vshrl.u32 %v2165, %v2181
  %v2184 = vor.u32 %v2182, %v2183
  %v2185 = vsub.s32 4294967266, %v2180
  %v2186 = vadd.s32 %v2185, 127
  %v2187 = vshll.u32 %v2186, 23
  %v2188 = vor.u32 4788187, %v2187
  %v2189 = vand.u32 2147483647, %v2188
  %v2191 = vcvt.s32.f32 %v2184
  %v2192 = vmul.f32 %v2191, %v2189
  %v2193 = vxor.u32 %v2192, 2147483648
  %v2194 = vsel %vm2073, %v2193, %v2192
  %v2195 = vsub.s32 4, %v2171
  %v2196 = vsel %vm2073, %v2195, %v2171
  %v2197 = vsel %vm2072, %v507, %v2194
  %v2198 = vsel %vm2072, 0, %v2196
  %v2199 = vmul.f32 %v2197, %v2197
  %v2200 = vmul.f32 %v2199, -0.001358992
  %v2201 = vadd.f32 %v2200, 0.041655596
  %v2202 = vmul.f32 %v2199, %v2201
  %v2203 = vadd.f32 %v2202, -0.4999988
  %v2204 = vmul.f32 %v2199, %v2203
  %v2205 = vadd.f32 1.0, %v2204
  %v2206 = vmul.f32 %v2197, %v2197
  %v2207 = vmul.f32 %v2206, -0.00019511016
  %v2208 = vadd.f32 %v2207, 0.008332121
  %v2209 = vmul.f32 %v2206, %v2208
  %v2210 = vadd.f32 %v2209, -0.16666654
  %v2211 = vmul.f32 %v2206, %v2210
  %v2212 = vadd.f32 %v2211, 1.0
  %v2213 = vmul.f32 %v2212, %v2197
  %vm2214 = vweird.f32 %v507
  %v2215 = vadd.s32 %v2198, 3
  %v2216 = vand.u32 %v2215, 3
  %vm2217 = vcmp.lt.s32.totalorder %v2216, 2
  %vm2218 = vcmp.eq.s32.totalorder %v2216, 0
  %v2219 = vxor.u32 %v2213, 2147483648
  %v2220 = vsel %vm2218, %v2205, %v2219
  %vm2221 = vcmp.eq.s32.totalorder %v2216, 2
  %v2222 = vxor.u32 %v2205, 2147483648
  %v2223 = vsel %vm2221, %v2222, %v2213
  %v2224 = vsel %vm2217, %v2220, %v2223
  %v2225 = vsel %vm2214, nan, %v2224
  %v2226 = vand.u32 2147483647, %v508
  %vm2227 = vcmp.le.f32.partialorder %v2226, 0.7853982
  %vm2228 = vcmp.lt.s32.totalorder %v508, 0
  %v2229 = vand.u32 %v508, 2139095040
  %v2230 = vshrl.u32 %v2229, 23
  %v2231 = vsub.s32 %v2230, 127
  %v2232 = vand.u32 2147483647, %v508
  %v2233 = vand.u32 %v2232, 8388607
  %v2234 = vor.u32 %v2233, 8388608
  %v2235 = vsub.s32 0, %v2234
  %v2236 = vadd.s32 %v2231, 1
  %vm2237 = vcmp.gt.s32.totalorder %v2236, 0
  %v2238 = vsel %vm2237, %v2236, 0
  %v2239 = vshrl.u32 %v2238, 5
  %v2240 = vand.u32 %v2238, 31
  %v2241 = vsub.s32 32, %v2240
  %v2242 = vshrl.u32 683565275, %v2241
  %v2243 = vshll.u32 683565275, %v2240
  %v2244 = vshrl.u32 2475754826, %v2241
  %v2245 = vor.u32 %v2243, %v2244
  %v2246 = vshll.u32 2475754826, %v2240
  %v2247 = vshrl.u32 2131351028, %v2241
  %v2248 = vor.u32 %v2246, %v2247
  %v2249 = vshll.u32 2131351028, %v2240
  %v2250 = vshrl.u32 2102212464, %v2241
  %v2251 = vor.u32 %v2249, %v2250
  %v2252 = vshll.u32 2102212464, %v2240
  %v2253 = vshrl.u32 920167782, %v2241
  %v2254 = vor.u32 %v2252, %v2253
  %v2255 = vshll.u32 920167782, %v2240
  %v2256 = vshrl.u32 1326507024, %v2241
  %v2257 = vor.u32 %v2255, %v2256
  %vm2258 = vcmp.lt.s32.totalorder %v2239, 1
  %vm2259 = vcmp.lt.s32.totalorder %v2239, 2
  %vm2260 = vcmp.lt.s32.totalorder %v2239, 3
  %vm2261 = vcmp.lt.s32.totalorder %v2239, 4
  %v2262 = vsel %vm2258, %v2242, %v2245
  %v2263 = vsel %vm2261, %v2251, 2102212464
  %v2264 = vsel %vm2260, %v2248, %v2263
  %v2265 = vsel %vm2259, %v2262, %v2264
  %v2266 = vsel %vm2258, %v2245, %v2248
  %v2267 = vsel %vm2261, %v2254, 920167782
  %v2268 = vsel %vm2260, %v2251, %v2267
  %v2269 = vsel %vm2259, %v2266, %v2268
  %v2270 = vsel %vm2258, %v2248, %v2251
  %v2271 = vsel %vm2261, %v2257, 1326507024
  %v2272 = vsel %vm2260, %v2254, %v2271
  %v2273 = vsel %vm2259, %v2270, %v2272
  %v2274 = vshll.u32 %v2234, 8
  %v2275 = vand.u32 %v2274, 65535
  %v2276 = vshrl.u32 %v2274, 16
  %v2277 = vand.u32 %v2273, 65535
  %v2278 = vshrl.u32 %v2273, 16
  %v2279 = vmul.u32 %v2275, %v2277
  %v2280 = vmul.u32 %v2275, %v2278
  %v2281 = vmul.u32 %v2276, %v2277
  %v2282 = vmul.u32 %v2276, %v2278
  %v2283 = vshll.u32 %v2280, 16
  %v2284 = vshrl.u32 %v2280, 16
  %v2285 = vshll.u32 %v2281, 16
  %v2286 = vshrl.u32 %v2281, 16
  %vm2287 = vc.u32 %v2279, %v2283
  %v2288 = vsel %vm2287, 1, 0
  %v2289 = vadd.s32 %v2279, %v2283
  %v2290 = vadd.s32 %v2282, %v2288
  %vm2291 = vc.u32 %v2289, %v2285
  %v2292 = vsel %vm2291, 1, 0
  %v2293 = vadd.s32 %v2289, %v2285
  %v2294 = vadd.s32 %v2290, %v2292
  %v2295 = vadd.s32 %v2294, %v2284
  %v2296 = vadd.s32 %v2295, %v2286
  %v2297 = vand.u32 %v2274, 65535
  %v2298 = vshrl.u32 %v2274, 16
  %v2299 = vand.u32 %v2269, 65535
  %v2300 = vshrl.u32 %v2269, 16
  %v2301 = vmul.u32 %v2297, %v2299
  %v2302 = vmul.u32 %v2297, %v2300
  %v2303 = vmul.u32 %v2298, %v2299
  %v2304 = vmul.u32 %v2298, %v2300
  %v2305 = vshll.u32 %v2302, 16
  %v2306 = vshrl.u32 %v2302, 16
  %v2307 = vshll.u32 %v2303, 16
  %v2308 = vshrl.u32 %v2303, 16
  %vm2309 = vc.u32 %v2301, %v2305
  %v2310 = vsel %vm2309, 1, 0
  %v2311 = vadd.s32 %v2301, %v2305
  %v2312 = vadd.s32 %v2304, %v2310
  %vm2313 = vc.u32 %v2311, %v2307
  %v2314 = vsel %vm2313, 1, 0
  %v2315 = vadd.s32 %v2311, %v2307
  %v2316 = vadd.s32 %v2312, %v2314
  %v2317 = vadd.s32 %v2316, %v2306
  %v2318 = vadd.s32 %v2317, %v2308
  %v2319 = vmul.u32 %v2274, %v2265
  %v2320 = vadd.s32 %v2296, %v2315
  %vm2321 = vc.u32 %v2296, %v2315
  %v2322 = vadd.s32 %v2318, 1
  %v2323 = vsel %vm2321, %v2322, %v2318
  %v2324 = vadd.s32 %v2319, %v2323
  %v2325 = vadd.s32 %v2324, 536870912
  %v2326 = vshrl.u32 %v2325, 30
  %v2327 = vshll.u32 %v2326, 30
  %v2328 = vsub.s32 %v2324, %v2327
  %vm2329 = vcmp.lt.s32.totalorder %v2328, 0
  %v2330 = vsub.s32 0, %v2328
  %v2331 = vsel %vm2329, %v2330, %v2328
  %v2332 = vclz %v2331
  %v2333 = vsub.s32 %v2332, 2
  %vm2334 = vcmp.gt.s32.totalorder 0, %v2333
  %v2335 = vsel %vm2334, 0, %v2333
  %v2336 = vsub.s32 32, %v2335
  %v2337 = vshll.u32 %v2328, %v2335
  %v2338 = vshrl.u32 %v2320, %v2336
  %v2339 = vor.u32 %v2337, %v2338
  %v2340 = vsub.s32 4294967266, %v2335
  %v2341 = vadd.s32 %v2340, 127
  %v2342 = vshll.u32 %v2341, 23
  %v2343 = vor.u32 4788187, %v2342
  %v2344 = vand.u32 2147483647, %v2343
  %v2346 = vcvt.s32.f32 %v2339
  %v2347 = vmul.f32 %v2346, %v2344
  %v2348 = vxor.u32 %v2347, 2147483648
  %v2349 = vsel %vm2228, %v2348, %v2347
  %v2350 = vsub.s32 4, %v2326
  %v2351 = vsel %vm2228, %v2350, %v2326
  %v2352 = vsel %vm2227, %v508, %v2349
  %v2353 = vsel %vm2227, 0, %v2351
  %v2354 = vmul.f32 %v2352, %v2352
  %v2355 = vmul.f32 %v2354, -0.001358992
  %v2356 = vadd.f32 %v2355, 0.041655596
  %v2357 = vmul.f32 %v2354, %v2356
  %v2358 = vadd.f32 %v2357, -0.4999988
  %v2359 = vmul.f32 %v2354, %v2358
  %v2360 = vadd.f32 1.0, %v2359
  %v2361 = vmul.f32 %v2352, %v2352
  %v2362 = vmul.f32 %v2361, -0.00019511016
  %v2363 = vadd.f32 %v2362, 0.008332121
  %v2364 = vmul.f32 %v2361, %v2363
  %v2365 = vadd.f32 %v2364, -0.16666654
  %v2366 = vmul.f32 %v2361, %v2365
  %v2367 = vadd.f32 %v2366, 1.0
  %v2368 = vmul.f32 %v2367, %v2352
  %vm2369 = vweird.f32 %v508
  %v2370 = vadd.s32 %v2353, 3
  %v2371 = vand.u32 %v2370, 3
  %vm2372 = vcmp.lt.s32.totalorder %v2371, 2
  %vm2373 = vcmp.eq.s32.totalorder %v2371, 0
  %v2374 = vxor.u32 %v2368, 2147483648
  %v2375 = vsel %vm2373, %v2360, %v2374
  %vm2376 = vcmp.eq.s32.totalorder %v2371, 2
  %v2377 = vxor.u32 %v2360, 2147483648
  %v2378 = vsel %vm2376, %v2377, %v2368
  %v2379 = vsel %vm2372, %v2375, %v2378
  %v2380 = vsel %vm2369, nan, %v2379
  %v2381 = vand.u32 2147483647, %v509
  %vm2382 = vcmp.le.f32.partialorder %v2381, 0.7853982
  %vm2383 = vcmp.lt.s32.totalorder %v509, 0
  %v2384 = vand.u32 %v509, 2139095040
  %v2385 = vshrl.u32 %v2384, 23
  %v2386 = vsub.s32 %v2385, 127
  %v2387 = vand.u32 2147483647, %v509
  %v2388 = vand.u32 %v2387, 8388607
  %v2389 = vor.u32 %v2388, 8388608
  %v2390 = vsub.s32 0, %v2389
  %v2391 = vadd.s32 %v2386, 1
  %vm2392 = vcmp.gt.s32.totalorder %v2391, 0
  %v2393 = vsel %vm2392, %v2391, 0
  %v2394 = vshrl.u32 %v2393, 5
  %v2395 = vand.u32 %v2393, 31
  %v2396 = vsub.s32 32, %v2395
  %v2397 = vshrl.u32 683565275, %v2396
  %v2398 = vshll.u32 683565275, %v2395
  %v2399 = vshrl.u32 2475754826, %v2396
  %v2400 = vor.u32 %v2398, %v2399
  %v2401 = vshll.u32 2475754826, %v2395
  %v2402 = vshrl.u32 2131351028, %v2396
  %v2403 = vor.u32 %v2401, %v2402
  %v2404 = vshll.u32 2131351028, %v2395
  %v2405 = vshrl.u32 2102212464, %v2396
  %v2406 = vor.u32 %v2404, %v2405
  %v2407 = vshll.u32 2102212464, %v2395
  %v2408 = vshrl.u32 920167782, %v2396
  %v2409 = vor.u32 %v2407, %v2408
  %v2410 = vshll.u32 920167782, %v2395
  %v2411 = vshrl.u32 1326507024, %v2396
  %v2412 = vor.u32 %v2410, %v2411
  %vm2413 = vcmp.lt.s32.totalorder %v2394, 1
  %vm2414 = vcmp.lt.s32.totalorder %v2394, 2
  %vm2415 = vcmp.lt.s32.totalorder %v2394, 3
  %vm2416 = vcmp.lt.s32.totalorder %v2394, 4
  %v2417 = vsel %vm2413, %v2397, %v2400
  %v2418 = vsel %vm2416, %v2406, 2102212464
  %v2419 = vsel %vm2415, %v2403, %v2418
  %v2420 = vsel %vm2414, %v2417, %v2419
  %v2421 = vsel %vm2413, %v2400, %v2403
  %v2422 = vsel %vm2416, %v2409, 920167782
  %v2423 = vsel %vm2415, %v2406, %v2422
  %v2424 = vsel %vm2414, %v2421, %v2423
  %v2425 = vsel %vm2413, %v2403, %v2406
  %v2426 = vsel %vm2416, %v2412, 1326507024
  %v2427 = vsel %vm2415, %v2409, %v2426
  %v2428 = vsel %vm2414, %v2425, %v2427
  %v2429 = vshll.u32 %v2389, 8
  %v2430 = vand.u32 %v2429, 65535
  %v2431 = vshrl.u32 %v2429, 16
  %v2432 = vand.u32 %v2428, 65535
  %v2433 = vshrl.u32 %v2428, 16
  %v2434 = vmul.u32 %v2430, %v2432
  %v2435 = vmul.u32 %v2430, %v2433
  %v2436 = vmul.u32 %v2431, %v2432
  %v2437 = vmul.u32 %v2431, %v2433
  %v2438 = vshll.u32 %v2435, 16
  %v2439 = vshrl.u32 %v2435, 16
  %v2440 = vshll.u32 %v2436, 16
  %v2441 = vshrl.u32 %v2436, 16
  %vm2442 = vc.u32 %v2434, %v2438
  %v2443 = vsel %vm2442, 1, 0
  %v2444 = vadd.s32 %v2434, %v2438
  %v2445 = vadd.s32 %v2437, %v2443
  %vm2446 = vc.u32 %v2444, %v2440
  %v2447 = vsel %vm2446, 1, 0
  %v2448 = vadd.s32 %v2444, %v2440
  %v2449 = vadd.s32 %v2445, %v2447
  %v2450 = vadd.s32 %v2449, %v2439
  %v2451 = vadd.s32 %v2450, %v2441
  %v2452 = vand.u32 %v2429, 65535
  %v2453 = vshrl.u32 %v2429, 16
  %v2454 = vand.u32 %v2424, 65535
  %v2455 = vshrl.u32 %v2424, 16
  %v2456 = vmul.u32 %v2452, %v2454
  %v2457 = vmul.u32 %v2452, %v2455
  %v2458 = vmul.u32 %v2453, %v2454
  %v2459 = vmul.u32 %v2453, %v2455
  %v2460 = vshll.u32 %v2457, 16
  %v2461 = vshrl.u32 %v2457, 16
  %v2462 = vshll.u32 %v2458, 16
  %v2463 = vshrl.u32 %v2458, 16
  %vm2464 = vc.u32 %v2456, %v2460
  %v2465 = vsel %vm2464, 1, 0
  %v2466 = vadd.s32 %v2456, %v2460
  %v2467 = vadd.s32 %v2459, %v2465
  %vm2468 = vc.u32 %v2466, %v2462
  %v2469 = vsel %vm2468, 1, 0
  %v2470 = vadd.s32 %v2466, %v2462
  %v2471 = vadd.s32 %v2467, %v2469
  %v2472 = vadd.s32 %v2471, %v2461
  %v2473 = vadd.s32 %v2472, %v2463
  %v2474 = vmul.u32 %v2429, %v2420
  %v2475 = vadd.s32 %v2451, %v2470
  %vm2476 = vc.u32 %v2451, %v2470
  %v2477 = vadd.s32 %v2473, 1
  %v2478 = vsel %vm2476, %v2477, %v2473
  %v2479 = vadd.s32 %v2474, %v2478
  %v2480 = vadd.s32 %v2479, 536870912
  %v2481 = vshrl.u32 %v2480, 30
  %v2482 = vshll.u32 %v2481, 30
  %v2483 = vsub.s32 %v2479, %v2482
  %vm2484 = vcmp.lt.s32.totalorder %v2483, 0
  %v2485 = vsub.s32 0, %v2483
  %v2486 = vsel %vm2484, %v2485, %v2483
  %v2487 = vclz %v2486
  %v2488 = vsub.s32 %v2487, 2
  %vm2489 = vcmp.gt.s32.totalorder 0, %v2488
  %v2490 = vsel %vm2489, 0, %v2488
  %v2491 = vsub.s32 32, %v2490
  %v2492 = vshll.u32 %v2483, %v2490
  %v2493 = vshrl.u32 %v2475, %v2491
  %v2494 = vor.u32 %v2492, %v2493
  %v2495 = vsub.s32 4294967266, %v2490
  %v2496 = vadd.s32 %v2495, 127
  %v2497 = vshll.u32 %v2496, 23
  %v2498 = vor.u32 4788187, %v2497
  %v2499 = vand.u32 2147483647, %v2498
  %v2501 = vcvt.s32.f32 %v2494
  %v2502 = vmul.f32 %v2501, %v2499
  %v2503 = vxor.u32 %v2502, 2147483648
  %v2504 = vsel %vm2383, %v2503, %v2502
  %v2505 = vsub.s32 4, %v2481
  %v2506 = vsel %vm2383, %v2505, %v2481
  %v2507 = vsel %vm2382, %v509, %v2504
  %v2508 = vsel %vm2382, 0, %v2506
  %v2509 = vmul.f32 %v2507, %v2507
  %v2510 = vmul.f32 %v2509, -0.001358992
  %v2511 = vadd.f32 %v2510, 0.041655596
  %v2512 = vmul.f32 %v2509, %v2511
  %v2513 = vadd.f32 %v2512, -0.4999988
  %v2514 = vmul.f32 %v2509, %v2513
  %v2515 = vadd.f32 1.0, %v2514
  %v2516 = vmul.f32 %v2507, %v2507
  %v2517 = vmul.f32 %v2516, -0.00019511016
  %v2518 = vadd.f32 %v2517, 0.008332121
  %v2519 = vmul.f32 %v2516, %v2518
  %v2520 = vadd.f32 %v2519, -0.16666654
  %v2521 = vmul.f32 %v2516, %v2520
  %v2522 = vadd.f32 %v2521, 1.0
  %v2523 = vmul.f32 %v2522, %v2507
  %vm2524 = vweird.f32 %v509
  %v2525 = vadd.s32 %v2508, 3
  %v2526 = vand.u32 %v2525, 3
  %vm2527 = vcmp.lt.s32.totalorder %v2526, 2
  %vm2528 = vcmp.eq.s32.totalorder %v2526, 0
  %v2529 = vxor.u32 %v2523, 2147483648
  %v2530 = vsel %vm2528, %v2515, %v2529
  %vm2531 = vcmp.eq.s32.totalorder %v2526, 2
  %v2532 = vxor.u32 %v2515, 2147483648
  %v2533 = vsel %vm2531, %v2532, %v2523
  %v2534 = vsel %vm2527, %v2530, %v2533
  %v2535 = vsel %vm2524, nan, %v2534
  %v2536 = vand.u32 2147483647, %v510
  %vm2537 = vcmp.le.f32.partialorder %v2536, 0.7853982
  %vm2538 = vcmp.lt.s32.totalorder %v510, 0
  %v2539 = vand.u32 %v510, 2139095040
  %v2540 = vshrl.u32 %v2539, 23
  %v2541 = vsub.s32 %v2540, 127
  %v2542 = vand.u32 2147483647, %v510
  %v2543 = vand.u32 %v2542, 8388607
  %v2544 = vor.u32 %v2543, 8388608
  %v2545 = vsub.s32 0, %v2544
  %v2546 = vadd.s32 %v2541, 1
  %vm2547 = vcmp.gt.s32.totalorder %v2546, 0
  %v2548 = vsel %vm2547, %v2546, 0
  %v2549 = vshrl.u32 %v2548, 5
  %v2550 = vand.u32 %v2548, 31
  %v2551 = vsub.s32 32, %v2550
  %v2552 = vshrl.u32 683565275, %v2551
  %v2553 = vshll.u32 683565275, %v2550
  %v2554 = vshrl.u32 2475754826, %v2551
  %v2555 = vor.u32 %v2553, %v2554
  %v2556 = vshll.u32 2475754826, %v2550
  %v2557 = vshrl.u32 2131351028, %v2551
  %v2558 = vor.u32 %v2556, %v2557
  %v2559 = vshll.u32 2131351028, %v2550
  %v2560 = vshrl.u32 2102212464, %v2551
  %v2561 = vor.u32 %v2559, %v2560
  %v2562 = vshll.u32 2102212464, %v2550
  %v2563 = vshrl.u32 920167782, %v2551
  %v2564 = vor.u32 %v2562, %v2563
  %v2565 = vshll.u32 920167782, %v2550
  %v2566 = vshrl.u32 1326507024, %v2551
  %v2567 = vor.u32 %v2565, %v2566
  %vm2568 = vcmp.lt.s32.totalorder %v2549, 1
  %vm2569 = vcmp.lt.s32.totalorder %v2549, 2
  %vm2570 = vcmp.lt.s32.totalorder %v2549, 3
  %vm2571 = vcmp.lt.s32.totalorder %v2549, 4
  %v2572 = vsel %vm2568, %v2552, %v2555
  %v2573 = vsel %vm2571, %v2561, 2102212464
  %v2574 = vsel %vm2570, %v2558, %v2573
  %v2575 = vsel %vm2569, %v2572, %v2574
  %v2576 = vsel %vm2568, %v2555, %v2558
  %v2577 = vsel %vm2571, %v2564, 920167782
  %v2578 = vsel %vm2570, %v2561, %v2577
  %v2579 = vsel %vm2569, %v2576, %v2578
  %v2580 = vsel %vm2568, %v2558, %v2561
  %v2581 = vsel %vm2571, %v2567, 1326507024
  %v2582 = vsel %vm2570, %v2564, %v2581
  %v2583 = vsel %vm2569, %v2580, %v2582
  %v2584 = vshll.u32 %v2544, 8
  %v2585 = vand.u32 %v2584, 65535
  %v2586 = vshrl.u32 %v2584, 16
  %v2587 = vand.u32 %v2583, 65535
  %v2588 = vshrl.u32 %v2583, 16
  %v2589 = vmul.u32 %v2585, %v2587
  %v2590 = vmul.u32 %v2585, %v2588
  %v2591 = vmul.u32 %v2586, %v2587
  %v2592 = vmul.u32 %v2586, %v2588
  %v2593 = vshll.u32 %v2590, 16
  %v2594 = vshrl.u32 %v2590, 16
  %v2595 = vshll.u32 %v2591, 16
  %v2596 = vshrl.u32 %v2591, 16
  %vm2597 = vc.u32 %v2589, %v2593
  %v2598 = vsel %vm2597, 1, 0
  %v2599 = vadd.s32 %v2589, %v2593
  %v2600 = vadd.s32 %v2592, %v2598
  %vm2601 = vc.u32 %v2599, %v2595
  %v2602 = vsel %vm2601, 1, 0
  %v2603 = vadd.s32 %v2599, %v2595
  %v2604 = vadd.s32 %v2600, %v2602
  %v2605 = vadd.s32 %v2604, %v2594
  %v2606 = vadd.s32 %v2605, %v2596
  %v2607 = vand.u32 %v2584, 65535
  %v2608 = vshrl.u32 %v2584, 16
  %v2609 = vand.u32 %v2579, 65535
  %v2610 = vshrl.u32 %v2579, 16
  %v2611 = vmul.u32 %v2607, %v2609
  %v2612 = vmul.u32 %v2607, %v2610
  %v2613 = vmul.u32 %v2608, %v2609
  %v2614 = vmul.u32 %v2608, %v2610
  %v2615 = vshll.u32 %v2612, 16
  %v2616 = vshrl.u32 %v2612, 16
  %v2617 = vshll.u32 %v2613, 16
  %v2618 = vshrl.u32 %v2613, 16
  %vm2619 = vc.u32 %v2611, %v2615
  %v2620 = vsel %vm2619, 1, 0
  %v2621 = vadd.s32 %v2611, %v2615
  %v2622 = vadd.s32 %v2614, %v2620
  %vm2623 = vc.u32 %v2621, %v2617
  %v2624 = vsel %vm2623, 1, 0
  %v2625 = vadd.s32 %v2621, %v2617
  %v2626 = vadd.s32 %v2622, %v2624
  %v2627 = vadd.s32 %v2626, %v2616
  %v2628 = vadd.s32 %v2627, %v2618
  %v2629 = vmul.u32 %v2584, %v2575
  %v2630 = vadd.s32 %v2606, %v2625
  %vm2631 = vc.u32 %v2606, %v2625
  %v2632 = vadd.s32 %v2628, 1
  %v2633 = vsel %vm2631, %v2632, %v2628
  %v2634 = vadd.s32 %v2629, %v2633
  %v2635 = vadd.s32 %v2634, 536870912
  %v2636 = vshrl.u32 %v2635, 30
  %v2637 = vshll.u32 %v2636, 30
  %v2638 = vsub.s32 %v2634, %v2637
  %vm2639 = vcmp.lt.s32.totalorder %v2638, 0
  %v2640 = vsub.s32 0, %v2638
  %v2641 = vsel %vm2639, %v2640, %v2638
  %v2642 = vclz %v2641
  %v2643 = vsub.s32 %v2642, 2
  %vm2644 = vcmp.gt.s32.totalorder 0, %v2643
  %v2645 = vsel %vm2644, 0, %v2643
  %v2646 = vsub.s32 32, %v2645
  %v2647 = vshll.u32 %v2638, %v2645
  %v2648 = vshrl.u32 %v2630, %v2646
  %v2649 = vor.u32 %v2647, %v2648
  %v2650 = vsub.s32 4294967266, %v2645
  %v2651 = vadd.s32 %v2650, 127
  %v2652 = vshll.u32 %v2651, 23
  %v2653 = vor.u32 4788187, %v2652
  %v2654 = vand.u32 2147483647, %v2653
  %v2656 = vcvt.s32.f32 %v2649
  %v2657 = vmul.f32 %v2656, %v2654
  %v2658 = vxor.u32 %v2657, 2147483648
  %v2659 = vsel %vm2538, %v2658, %v2657
  %v2660 = vsub.s32 4, %v2636
  %v2661 = vsel %vm2538, %v2660, %v2636
  %v2662 = vsel %vm2537, %v510, %v2659
  %v2663 = vsel %vm2537, 0, %v2661
  %v2664 = vmul.f32 %v2662, %v2662
  %v2665 = vmul.f32 %v2664, -0.001358992
  %v2666 = vadd.f32 %v2665, 0.041655596
  %v2667 = vmul.f32 %v2664, %v2666
  %v2668 = vadd.f32 %v2667, -0.4999988
  %v2669 = vmul.f32 %v2664, %v2668
  %v2670 = vadd.f32 1.0, %v2669
  %v2671 = vmul.f32 %v2662, %v2662
  %v2672 = vmul.f32 %v2671, -0.00019511016
  %v2673 = vadd.f32 %v2672, 0.008332121
  %v2674 = vmul.f32 %v2671, %v2673
  %v2675 = vadd.f32 %v2674, -0.16666654
  %v2676 = vmul.f32 %v2671, %v2675
  %v2677 = vadd.f32 %v2676, 1.0
  %v2678 = vmul.f32 %v2677, %v2662
  %vm2679 = vweird.f32 %v510
  %v2680 = vadd.s32 %v2663, 3
  %v2681 = vand.u32 %v2680, 3
  %vm2682 = vcmp.lt.s32.totalorder %v2681, 2
  %vm2683 = vcmp.eq.s32.totalorder %v2681, 0
  %v2684 = vxor.u32 %v2678, 2147483648
  %v2685 = vsel %vm2683, %v2670, %v2684
  %vm2686 = vcmp.eq.s32.totalorder %v2681, 2
  %v2687 = vxor.u32 %v2670, 2147483648
  %v2688 = vsel %vm2686, %v2687, %v2678
  %v2689 = vsel %vm2682, %v2685, %v2688
  %v2690 = vsel %vm2679, nan, %v2689
  %v2691 = vand.u32 2147483647, %v511
  %vm2692 = vcmp.le.f32.partialorder %v2691, 0.7853982
  %vm2693 = vcmp.lt.s32.totalorder %v511, 0
  %v2694 = vand.u32 %v511, 2139095040
  %v2695 = vshrl.u32 %v2694, 23
  %v2696 = vsub.s32 %v2695, 127
  %v2697 = vand.u32 2147483647, %v511
  %v2698 = vand.u32 %v2697, 8388607
  %v2699 = vor.u32 %v2698, 8388608
  %v2700 = vsub.s32 0, %v2699
  %v2701 = vadd.s32 %v2696, 1
  %vm2702 = vcmp.gt.s32.totalorder %v2701, 0
  %v2703 = vsel %vm2702, %v2701, 0
  %v2704 = vshrl.u32 %v2703, 5
  %v2705 = vand.u32 %v2703, 31
  %v2706 = vsub.s32 32, %v2705
  %v2707 = vshrl.u32 683565275, %v2706
  %v2708 = vshll.u32 683565275, %v2705
  %v2709 = vshrl.u32 2475754826, %v2706
  %v2710 = vor.u32 %v2708, %v2709
  %v2711 = vshll.u32 2475754826, %v2705
  %v2712 = vshrl.u32 2131351028, %v2706
  %v2713 = vor.u32 %v2711, %v2712
  %v2714 = vshll.u32 2131351028, %v2705
  %v2715 = vshrl.u32 2102212464, %v2706
  %v2716 = vor.u32 %v2714, %v2715
  %v2717 = vshll.u32 2102212464, %v2705
  %v2718 = vshrl.u32 920167782, %v2706
  %v2719 = vor.u32 %v2717, %v2718
  %v2720 = vshll.u32 920167782, %v2705
  %v2721 = vshrl.u32 1326507024, %v2706
  %v2722 = vor.u32 %v2720, %v2721
  %vm2723 = vcmp.lt.s32.totalorder %v2704, 1
  %vm2724 = vcmp.lt.s32.totalorder %v2704, 2
  %vm2725 = vcmp.lt.s32.totalorder %v2704, 3
  %vm2726 = vcmp.lt.s32.totalorder %v2704, 4
  %v2727 = vsel %vm2723, %v2707, %v2710
  %v2728 = vsel %vm2726, %v2716, 2102212464
  %v2729 = vsel %vm2725, %v2713, %v2728
  %v2730 = vsel %vm2724, %v2727, %v2729
  %v2731 = vsel %vm2723, %v2710, %v2713
  %v2732 = vsel %vm2726, %v2719, 920167782
  %v2733 = vsel %vm2725, %v2716, %v2732
  %v2734 = vsel %vm2724, %v2731, %v2733
  %v2735 = vsel %vm2723, %v2713, %v2716
  %v2736 = vsel %vm2726, %v2722, 1326507024
  %v2737 = vsel %vm2725, %v2719, %v2736
  %v2738 = vsel %vm2724, %v2735, %v2737
  %v2739 = vshll.u32 %v2699, 8
  %v2740 = vand.u32 %v2739, 65535
  %v2741 = vshrl.u32 %v2739, 16
  %v2742 = vand.u32 %v2738, 65535
  %v2743 = vshrl.u32 %v2738, 16
  %v2744 = vmul.u32 %v2740, %v2742
  %v2745 = vmul.u32 %v2740, %v2743
  %v2746 = vmul.u32 %v2741, %v2742
  %v2747 = vmul.u32 %v2741, %v2743
  %v2748 = vshll.u32 %v2745, 16
  %v2749 = vshrl.u32 %v2745, 16
  %v2750 = vshll.u32 %v2746, 16
  %v2751 = vshrl.u32 %v2746, 16
  %vm2752 = vc.u32 %v2744, %v2748
  %v2753 = vsel %vm2752, 1, 0
  %v2754 = vadd.s32 %v2744, %v2748
  %v2755 = vadd.s32 %v2747, %v2753
  %vm2756 = vc.u32 %v2754, %v2750
  %v2757 = vsel %vm2756, 1, 0
  %v2758 = vadd.s32 %v2754, %v2750
  %v2759 = vadd.s32 %v2755, %v2757
  %v2760 = vadd.s32 %v2759, %v2749
  %v2761 = vadd.s32 %v2760, %v2751
  %v2762 = vand.u32 %v2739, 65535
  %v2763 = vshrl.u32 %v2739, 16
  %v2764 = vand.u32 %v2734, 65535
  %v2765 = vshrl.u32 %v2734, 16
  %v2766 = vmul.u32 %v2762, %v2764
  %v2767 = vmul.u32 %v2762, %v2765
  %v2768 = vmul.u32 %v2763, %v2764
  %v2769 = vmul.u32 %v2763, %v2765
  %v2770 = vshll.u32 %v2767, 16
  %v2771 = vshrl.u32 %v2767, 16
  %v2772 = vshll.u32 %v2768, 16
  %v2773 = vshrl.u32 %v2768, 16
  %vm2774 = vc.u32 %v2766, %v2770
  %v2775 = vsel %vm2774, 1, 0
  %v2776 = vadd.s32 %v2766, %v2770
  %v2777 = vadd.s32 %v2769, %v2775
  %vm2778 = vc.u32 %v2776, %v2772
  %v2779 = vsel %vm2778, 1, 0
  %v2780 = vadd.s32 %v2776, %v2772
  %v2781 = vadd.s32 %v2777, %v2779
  %v2782 = vadd.s32 %v2781, %v2771
  %v2783 = vadd.s32 %v2782, %v2773
  %v2784 = vmul.u32 %v2739, %v2730
  %v2785 = vadd.s32 %v2761, %v2780
  %vm2786 = vc.u32 %v2761, %v2780
  %v2787 = vadd.s32 %v2783, 1
  %v2788 = vsel %vm2786, %v2787, %v2783
  %v2789 = vadd.s32 %v2784, %v2788
  %v2790 = vadd.s32 %v2789, 536870912
  %v2791 = vshrl.u32 %v2790, 30
  %v2792 = vshll.u32 %v2791, 30
  %v2793 = vsub.s32 %v2789, %v2792
  %vm2794 = vcmp.lt.s32.totalorder %v2793, 0
  %v2795 = vsub.s32 0, %v2793
  %v2796 = vsel %vm2794, %v2795, %v2793
  %v2797 = vclz %v2796
  %v2798 = vsub.s32 %v2797, 2
  %vm2799 = vcmp.gt.s32.totalorder 0, %v2798
  %v2800 = vsel %vm2799, 0, %v2798
  %v2801 = vsub.s32 32, %v2800
  %v2802 = vshll.u32 %v2793, %v2800
  %v2803 = vshrl.u32 %v2785, %v2801
  %v2804 = vor.u32 %v2802, %v2803
  %v2805 = vsub.s32 4294967266, %v2800
  %v2806 = vadd.s32 %v2805, 127
  %v2807 = vshll.u32 %v2806, 23
  %v2808 = vor.u32 4788187, %v2807
  %v2809 = vand.u32 2147483647, %v2808
  %v2811 = vcvt.s32.f32 %v2804
  %v2812 = vmul.f32 %v2811, %v2809
  %v2813 = vxor.u32 %v2812, 2147483648
  %v2814 = vsel %vm2693, %v2813, %v2812
  %v2815 = vsub.s32 4, %v2791
  %v2816 = vsel %vm2693, %v2815, %v2791
  %v2817 = vsel %vm2692, %v511, %v2814
  %v2818 = vsel %vm2692, 0, %v2816
  %v2819 = vmul.f32 %v2817, %v2817
  %v2820 = vmul.f32 %v2819, -0.001358992
  %v2821 = vadd.f32 %v2820, 0.041655596
  %v2822 = vmul.f32 %v2819, %v2821
  %v2823 = vadd.f32 %v2822, -0.4999988
  %v2824 = vmul.f32 %v2819, %v2823
  %v2825 = vadd.f32 1.0, %v2824
  %v2826 = vmul.f32 %v2817, %v2817
  %v2827 = vmul.f32 %v2826, -0.00019511016
  %v2828 = vadd.f32 %v2827, 0.008332121
  %v2829 = vmul.f32 %v2826, %v2828
  %v2830 = vadd.f32 %v2829, -0.16666654
  %v2831 = vmul.f32 %v2826, %v2830
  %v2832 = vadd.f32 %v2831, 1.0
  %v2833 = vmul.f32 %v2832, %v2817
  %vm2834 = vweird.f32 %v511
  %v2835 = vadd.s32 %v2818, 3
  %v2836 = vand.u32 %v2835, 3
  %vm2837 = vcmp.lt.s32.totalorder %v2836, 2
  %vm2838 = vcmp.eq.s32.totalorder %v2836, 0
  %v2839 = vxor.u32 %v2833, 2147483648
  %v2840 = vsel %vm2838, %v2825, %v2839
  %vm2841 = vcmp.eq.s32.totalorder %v2836, 2
  %v2842 = vxor.u32 %v2825, 2147483648
  %v2843 = vsel %vm2841, %v2842, %v2833
  %v2844 = vsel %vm2837, %v2840, %v2843
  %v2845 = vsel %vm2834, nan, %v2844
  %v2846 = vand.u32 2147483647, %v512
  %vm2847 = vcmp.le.f32.partialorder %v2846, 0.7853982
  %vm2848 = vcmp.lt.s32.totalorder %v512, 0
  %v2849 = vand.u32 %v512, 2139095040
  %v2850 = vshrl.u32 %v2849, 23
  %v2851 = vsub.s32 %v2850, 127
  %v2852 = vand.u32 2147483647, %v512
  %v2853 = vand.u32 %v2852, 8388607
  %v2854 = vor.u32 %v2853, 8388608
  %v2855 = vsub.s32 0, %v2854
  %v2856 = vadd.s32 %v2851, 1
  %vm2857 = vcmp.gt.s32.totalorder %v2856, 0
  %v2858 = vsel %vm2857, %v2856, 0
  %v2859 = vshrl.u32 %v2858, 5
  %v2860 = vand.u32 %v2858, 31
  %v2861 = vsub.s32 32, %v2860
  %v2862 = vshrl.u32 683565275, %v2861
  %v2863 = vshll.u32 683565275, %v2860
  %v2864 = vshrl.u32 2475754826, %v2861
  %v2865 = vor.u32 %v2863, %v2864
  %v2866 = vshll.u32 2475754826, %v2860
  %v2867 = vshrl.u32 2131351028, %v2861
  %v2868 = vor.u32 %v2866, %v2867
  %v2869 = vshll.u32 2131351028, %v2860
  %v2870 = vshrl.u32 2102212464, %v2861
  %v2871 = vor.u32 %v2869, %v2870
  %v2872 = vshll.u32 2102212464, %v2860
  %v2873 = vshrl.u32 920167782, %v2861
  %v2874 = vor.u32 %v2872, %v2873
  %v2875 = vshll.u32 920167782, %v2860
  %v2876 = vshrl.u32 1326507024, %v2861
  %v2877 = vor.u32 %v2875, %v2876
  %vm2878 = vcmp.lt.s32.totalorder %v2859, 1
  %vm2879 = vcmp.lt.s32.totalorder %v2859, 2
  %vm2880 = vcmp.lt.s32.totalorder %v2859, 3
  %vm2881 = vcmp.lt.s32.totalorder %v2859, 4
  %v2882 = vsel %vm2878, %v2862, %v2865
  %v2883 = vsel %vm2881, %v2871, 2102212464
  %v2884 = vsel %vm2880, %v2868, %v2883
  %v2885 = vsel %vm2879, %v2882, %v2884
  %v2886 = vsel %vm2878, %v2865, %v2868
  %v2887 = vsel %vm2881, %v2874, 920167782
  %v2888 = vsel %vm2880, %v2871, %v2887
  %v2889 = vsel %vm2879, %v2886, %v2888
  %v2890 = vsel %vm2878, %v2868, %v2871
  %v2891 = vsel %vm2881, %v2877, 1326507024
  %v2892 = vsel %vm2880, %v2874, %v2891
  %v2893 = vsel %vm2879, %v2890, %v2892
  %v2894 = vshll.u32 %v2854, 8
  %v2895 = vand.u32 %v2894, 65535
  %v2896 = vshrl.u32 %v2894, 16
  %v2897 = vand.u32 %v2893, 65535
  %v2898 = vshrl.u32 %v2893, 16
  %v2899 = vmul.u32 %v2895, %v2897
  %v2900 = vmul.u32 %v2895, %v2898
  %v2901 = vmul.u32 %v2896, %v2897
  %v2902 = vmul.u32 %v2896, %v2898
  %v2903 = vshll.u32 %v2900, 16
  %v2904 = vshrl.u32 %v2900, 16
  %v2905 = vshll.u32 %v2901, 16
  %v2906 = vshrl.u32 %v2901, 16
  %vm2907 = vc.u32 %v2899, %v2903
  %v2908 = vsel %vm2907, 1, 0
  %v2909 = vadd.s32 %v2899, %v2903
  %v2910 = vadd.s32 %v2902, %v2908
  %vm2911 = vc.u32 %v2909, %v2905
  %v2912 = vsel %vm2911, 1, 0
  %v2913 = vadd.s32 %v2909, %v2905
  %v2914 = vadd.s32 %v2910, %v2912
  %v2915 = vadd.s32 %v2914, %v2904
  %v2916 = vadd.s32 %v2915, %v2906
  %v2917 = vand.u32 %v2894, 65535
  %v2918 = vshrl.u32 %v2894, 16
  %v2919 = vand.u32 %v2889, 65535
  %v2920 = vshrl.u32 %v2889, 16
  %v2921 = vmul.u32 %v2917, %v2919
  %v2922 = vmul.u32 %v2917, %v2920
  %v2923 = vmul.u32 %v2918, %v2919
  %v2924 = vmul.u32 %v2918, %v2920
  %v2925 = vshll.u32 %v2922, 16
  %v2926 = vshrl.u32 %v2922, 16
  %v2927 = vshll.u32 %v2923, 16
  %v2928 = vshrl.u32 %v2923, 16
  %vm2929 = vc.u32 %v2921, %v2925
  %v2930 = vsel %vm2929, 1, 0
  %v2931 = vadd.s32 %v2921, %v2925
  %v2932 = vadd.s32 %v2924, %v2930
  %vm2933 = vc.u32 %v2931, %v2927
  %v2934 = vsel %vm2933, 1, 0
  %v2935 = vadd.s32 %v2931, %v2927
  %v2936 = vadd.s32 %v2932, %v2934
  %v2937 = vadd.s32 %v2936, %v2926
  %v2938 = vadd.s32 %v2937, %v2928
  %v2939 = vmul.u32 %v2894, %v2885
  %v2940 = vadd.s32 %v2916, %v2935
  %vm2941 = vc.u32 %v2916, %v2935
  %v2942 = vadd.s32 %v2938, 1
  %v2943 = vsel %vm2941, %v2942, %v2938
  %v2944 = vadd.s32 %v2939, %v2943
  %v2945 = vadd.s32 %v2944, 536870912
  %v2946 = vshrl.u32 %v2945, 30
  %v2947 = vshll.u32 %v2946, 30
  %v2948 = vsub.s32 %v2944, %v2947
  %vm2949 = vcmp.lt.s32.totalorder %v2948, 0
  %v2950 = vsub.s32 0, %v2948
  %v2951 = vsel %vm2949, %v2950, %v2948
  %v2952 = vclz %v2951
  %v2953 = vsub.s32 %v2952, 2
  %vm2954 = vcmp.gt.s32.totalorder 0, %v2953
  %v2955 = vsel %vm2954, 0, %v2953
  %v2956 = vsub.s32 32, %v2955
  %v2957 = vshll.u32 %v2948, %v2955
  %v2958 = vshrl.u32 %v2940, %v2956
  %v2959 = vor.u32 %v2957, %v2958
  %v2960 = vsub.s32 4294967266, %v2955
  %v2961 = vadd.s32 %v2960, 127
  %v2962 = vshll.u32 %v2961, 23
  %v2963 = vor.u32 4788187, %v2962
  %v2964 = vand.u32 2147483647, %v2963
  %v2966 = vcvt.s32.f32 %v2959
  %v2967 = vmul.f32 %v2966, %v2964
  %v2968 = vxor.u32 %v2967, 2147483648
  %v2969 = vsel %vm2848, %v2968, %v2967
  %v2970 = vsub.s32 4, %v2946
  %v2971 = vsel %vm2848, %v2970, %v2946
  %v2972 = vsel %vm2847, %v512, %v2969
  %v2973 = vsel %vm2847, 0, %v2971
  %v2974 = vmul.f32 %v2972, %v2972
  %v2975 = vmul.f32 %v2974, -0.001358992
  %v2976 = vadd.f32 %v2975, 0.041655596
  %v2977 = vmul.f32 %v2974, %v2976
  %v2978 = vadd.f32 %v2977, -0.4999988
  %v2979 = vmul.f32 %v2974, %v2978
  %v2980 = vadd.f32 1.0, %v2979
  %v2981 = vmul.f32 %v2972, %v2972
  %v2982 = vmul.f32 %v2981, -0.00019511016
  %v2983 = vadd.f32 %v2982, 0.008332121
  %v2984 = vmul.f32 %v2981, %v2983
  %v2985 = vadd.f32 %v2984, -0.16666654
  %v2986 = vmul.f32 %v2981, %v2985
  %v2987 = vadd.f32 %v2986, 1.0
  %v2988 = vmul.f32 %v2987, %v2972
  %vm2989 = vweird.f32 %v512
  %v2990 = vadd.s32 %v2973, 3
  %v2991 = vand.u32 %v2990, 3
  %vm2992 = vcmp.lt.s32.totalorder %v2991, 2
  %vm2993 = vcmp.eq.s32.totalorder %v2991, 0
  %v2994 = vxor.u32 %v2988, 2147483648
  %v2995 = vsel %vm2993, %v2980, %v2994
  %vm2996 = vcmp.eq.s32.totalorder %v2991, 2
  %v2997 = vxor.u32 %v2980, 2147483648
  %v2998 = vsel %vm2996, %v2997, %v2988
  %v2999 = vsel %vm2992, %v2995, %v2998
  %v3000 = vsel %vm2989, nan, %v2999
  %v3001 = vmul.f32 %v420, %v1915
  %v3002 = vmul.f32 %v432, %v2070
  %v3003 = vmul.f32 %v444, %v2225
  %v3004 = vmul.f32 %v456, %v2380
  %v3005 = vmul.f32 %v468, %v2535
  %v3006 = vmul.f32 %v480, %v2690
  %v3007 = vmul.f32 %v492, %v2845
  %v3008 = vmul.f32 %v504, %v3000
  %3009 = vst [vmem:[%s1 + $0x20] sm:$0xff] %v3001
  %3010 = vst [vmem:[%s1 + $0x28] sm:$0xff] %v3002
  %3011 = vst [vmem:[%s1 + $0x30] sm:$0xff] %v3003
  %3012 = vst [vmem:[%s1 + $0x38] sm:$0xff] %v3004
  %3013 = vst [vmem:[%s1 + $0x60] sm:$0xff] %v3005
  %3014 = vst [vmem:[%s1 + $0x68] sm:$0xff] %v3006
  %3015 = vst [vmem:[%s1 + $0x70] sm:$0xff] %v3007
  %3016 = vst [vmem:[%s1 + $0x78] sm:$0xff] %v3008
  // Predicated region
  $region2: #{mock_model_forward.1} parent=0 // pred_check
    _
  $region3: #{mock_model_forward.1} parent=0 // pred_check_branch
    %3018 = sbr.rel (0) target = $region5
  $region4: #{mock_model_forward.1} parent=0 // pred_region
    _
  $region5: #{mock_model_forward.1} parent=0 // pred_fallthru
    _
  // Predicated region
  $region6: #{mock_model_forward.1} parent=0 // pred_check
    _
  $region7: #{mock_model_forward.1} parent=0 // pred_check_branch
    %3020 = sbr.rel (0) target = $region9
  $region8: #{mock_model_forward.1} parent=0 // pred_region
    _
  $region9: #{mock_model_forward.1} parent=0 // pred_fallthru
    _

</llo_original>
